<compile_context>
chip_gen: v7x
topology: tpu7x:2x2x1
jax: 0.10.0
libtpu: 0.0.40
codegen_flags: <defaults>
</compile_context>

<pallas_src>
import functools
import math

import jax
import jax.numpy as jnp
from jax import lax
from jax.experimental import pallas as pl
from jax.experimental.pallas import tpu as pltpu  # noqa: F401  (gridless kernel; kept per template)


def _dot_nt(a, b):
    """a @ b.T via dot_general (contract the last dim of both operands; MXU 'NT')."""
    return lax.dot_general(a, b, (((1,), (1,)), ((), ())),
                           preferred_element_type=jnp.float32)


def _layer_norm(h, gamma, beta, eps=1e-5):
    mu = jnp.mean(h, axis=-1, keepdims=True)
    var = jnp.mean((h - mu) * (h - mu), axis=-1, keepdims=True)
    return (h - mu) * lax.rsqrt(var + eps) * gamma + beta


def _encoder_layer_kernel(x_ref, wq_ref, wk_ref, wv_ref, hmask_ref, esel_ref,
                          wfc3_ref, w1_ref, b1_ref, g1_ref, be1_ref,
                          g2_ref, be2_ref, o_ref, *, n_heads, d_k, n_sel):
    f32 = jnp.float32
    x = x_ref[...]                                                   # (N, D)

    # --- all-head Q/K/V projections (weights pre-transposed in the wrapper) ---
    q_all = jnp.dot(x, wq_ref[...], preferred_element_type=f32)      # (N, D)
    k_all = jnp.dot(x, wk_ref[...], preferred_element_type=f32)      # (N, D)
    v_all = jnp.dot(x, wv_ref[...], preferred_element_type=f32)      # (N, D)

    scale = f32(1.0 / math.sqrt(d_k))

    # --- per-head attention (statically unrolled); head selection via 0/1 masks ---
    o_packed = jnp.zeros(x.shape, f32)        # token-packed head outputs (N, H*d_v)
    for h in range(n_heads):
        m = hmask_ref[h]                      # (1, D): ones on head-h columns
        s = _dot_nt(q_all * m, k_all) * scale                        # == q_h @ k_h^T (N, N)
        s = s - jnp.max(s, axis=-1, keepdims=True)
        p = jnp.exp(s)
        p = p * pl.reciprocal(jnp.sum(p, axis=-1, keepdims=True), approx=True)
        # p @ v_h, landing directly in head-h columns (mask zeroes all other columns).
        o_packed = o_packed + jnp.dot(p, v_all * m, preferred_element_type=f32)

    # --- PyTorch transpose(1,2).reshape scramble fused with fc:
    #       scrambled[r, q*N + n] = o_packed[n, r*g + q]
    #       fc = scrambled @ Wfc^T = sum_q (E_q @ o_packed^T) @ WfcT[q*N:(q+1)*N, :]
    #     E_q are constant 0/1 selection matrices built in the wrapper.
    fc = jnp.zeros(x.shape, f32)
    for q in range(n_sel):
        b_q = _dot_nt(esel_ref[q], o_packed)                         # (N, N)
        fc = fc + jnp.dot(b_q, wfc3_ref[q], preferred_element_type=f32)

    # --- residual + LayerNorm 1 ---
    x1 = _layer_norm(fc + x, g1_ref[...], be1_ref[...])

    # --- l1 (linear + bias), residual + LayerNorm 2 ---
    y = jnp.dot(x1, w1_ref[...], preferred_element_type=f32) + b1_ref[...]
    o_ref[...] = _layer_norm(y + x1, g2_ref[...], be2_ref[...])


def encoder_layer_forward(x, params, *, n_heads):
    N, D = x.shape
    assert D % n_heads == 0, "input_dim must be divisible by n_heads"
    d_k = D // n_heads
    C = n_heads * d_k                          # = D (packed head width)
    assert C % N == 0, (
        "fused scramble formulation requires seq_len to divide n_heads*d_v")
    # TODO(synk): for general seq_len (N not dividing H*d_v) the torch scramble needs an
    # in-kernel gather/reshape with no clean Pallas equivalent; fall back to two calls then.
    g = C // N

    WQ, WK, WV, Wfc, W1, b1, g1, be1, g2, be2 = params
    f32 = jnp.float32

    # Head-column masks, shape (H, 1, D): ones on columns [h*d_k, (h+1)*d_k).
    col = jnp.arange(D)
    hmask = jnp.stack(
        [((col >= h * d_k) & (col < (h + 1) * d_k)).astype(f32)[None, :]
         for h in range(n_heads)])                                   # (H, 1, D)

    # Scramble selection constants E_q[r, i] = [i == r*g + q], shape (g, N, C).
    i_idx = jnp.arange(C)[None, :]
    r_idx = jnp.arange(N)[:, None]
    e_sel = jnp.stack(
        [(i_idx == (r_idx * g + q)).astype(f32) for q in range(g)])  # (g, N, C)

    # fc weight, transposed and split into the row blocks used by the scramble.
    wfc3 = Wfc.T.reshape(g, N, D)                                    # (g, N, D)

    args = (x,
            WQ.T, WK.T, WV.T,                      # (D, D) each, lane-dense x @ W
            hmask, e_sel, wfc3,
            W1.T,
            b1.reshape(1, D),
            g1.reshape(1, D), be1.reshape(1, D),
            g2.reshape(1, D), be2.reshape(1, D))

    flops = int(3 * 2 * N * D * D                       # QKV projections
                + n_heads * (2 * N * N * D + 2 * N * N * D)   # QK^T and PV (masked, D-wide)
                + g * (2 * N * N * C + 2 * N * N * D)   # scramble selection + fc
                + 2 * N * D * D)                        # l1
    transcendentals = int(n_heads * N * N + 2 * N)
    bytes_accessed = int(4 * (sum(int(a.size) for a in args) + N * D))

    kernel = functools.partial(_encoder_layer_kernel,
                               n_heads=n_heads, d_k=d_k, n_sel=g)
    return pl.pallas_call(
        kernel,
        out_shape=jax.ShapeDtypeStruct((N, D), jnp.float32),
        cost_estimate=pl.CostEstimate(flops=flops,
                                      transcendentals=transcendentals,
                                      bytes_accessed=bytes_accessed),
    )(*args)


# ----------------------------------------------------------------------------
# Pure-JAX reference replicating the PyTorch forward exactly, for validation.
# ----------------------------------------------------------------------------
def reference_forward(x, params, *, n_heads):
    N, D = x.shape
    d_k = D // n_heads
    WQ, WK, WV, Wfc, W1, b1, g1, be1, g2, be2 = params

    def split_heads(W):
        return jnp.transpose((x @ W.T).reshape(N, n_heads, d_k), (1, 0, 2))

    Q, K, V = split_heads(WQ), split_heads(WK), split_heads(WV)      # (H, N, d_k)
    s = jnp.einsum('hnd,hmd->hnm', Q, K) / math.sqrt(d_k)
    s = jax.nn.softmax(s, axis=-1)
    o = jnp.einsum('hnm,hmd->hnd', s, V)                             # (H, N, d_k)
    o = jnp.transpose(o, (0, 2, 1)).reshape(N, n_heads * d_k)        # PyTorch scramble
    o = o @ Wfc.T

    def ln(h, g, b):
        mu = jnp.mean(h, axis=-1, keepdims=True)
        var = jnp.mean((h - mu) ** 2, axis=-1, keepdims=True)
        return (h - mu) / jnp.sqrt(var + 1e-5) * g + b

    x1 = ln(o + x, g1, be1)
    x2 = ln(x1 @ W1.T + b1 + x1, g2, be2)
    return x2


if __name__ == "__main__":
    N, D, H = 8, 32, 4          # seq=8, input_dim=32, n_heads=4 -> d_k = 8

    key = jax.random.PRNGKey(0)
    ks = jax.random.split(key, 8)

    X   = jax.random.normal(ks[0], (N, D), dtype=jnp.float32)
    WQ  = 0.1 * jax.random.normal(ks[1], (D, D), dtype=jnp.float32)   # (H*d_k, D)
    WK  = 0.1 * jax.random.normal(ks[2], (D, D), dtype=jnp.float32)
    WV  = 0.1 * jax.random.normal(ks[3], (D, D), dtype=jnp.float32)
    Wfc = 0.1 * jax.random.normal(ks[4], (D, D), dtype=jnp.float32)
    W1  = 0.1 * jax.random.normal(ks[5], (D, D), dtype=jnp.float32)
    b1  = 0.1 * jax.random.normal(ks[6], (D,),  dtype=jnp.float32)
    g1  = jnp.ones((D,), jnp.float32);  be1 = jnp.zeros((D,), jnp.float32)
    g2  = jnp.ones((D,), jnp.float32);  be2 = jnp.zeros((D,), jnp.float32)

    params = (WQ, WK, WV, Wfc, W1, b1, g1, be1, g2, be2)

    out = encoder_layer_forward(X, params, n_heads=H)
    out = jax.block_until_ready(out)

    ref = reference_forward(X, params, n_heads=H)
    assert out.shape == (N, D)
    # Tolerance is loosened from 1e-4 to 1e-2 solely because the softmax denominator now
    # uses the EUP approximate reciprocal; structural bugs would produce O(0.1..1) errors.
    assert jnp.allclose(out, ref, atol=1e-2, rtol=1e-2), (
        f"max abs err {jnp.max(jnp.abs(out - ref))}")

    print("KERNEL_OK")
</pallas_src>

<mosaic_0001>
module attributes {stable_mosaic.version = 11 : i64} {
  func.func @_encoder_layer_kernel(%arg0: memref<8x32xf32, #tpu.memory_space<vmem>>, %arg1: memref<32x32xf32, #tpu.memory_space<vmem>>, %arg2: memref<32x32xf32, #tpu.memory_space<vmem>>, %arg3: memref<32x32xf32, #tpu.memory_space<vmem>>, %arg4: memref<4x1x32xf32, #tpu.memory_space<vmem>>, %arg5: memref<4x8x32xf32, #tpu.memory_space<vmem>>, %arg6: memref<4x8x32xf32, #tpu.memory_space<vmem>>, %arg7: memref<32x32xf32, #tpu.memory_space<vmem>>, %arg8: memref<1x32xf32, #tpu.memory_space<vmem>>, %arg9: memref<1x32xf32, #tpu.memory_space<vmem>>, %arg10: memref<1x32xf32, #tpu.memory_space<vmem>>, %arg11: memref<1x32xf32, #tpu.memory_space<vmem>>, %arg12: memref<1x32xf32, #tpu.memory_space<vmem>>, %arg13: memref<8x32xf32, #tpu.memory_space<vmem>>) attributes {dimension_semantics = [], scalar_prefetch = 0 : i64, scratch_operands = 0 : i64, tpu.core_type = #tpu.core_type<tc>} {
    %c0 = arith.constant 0 : index
    %c0_0 = arith.constant 0 : index
    %0 = vector.load %arg0[%c0, %c0_0] : memref<8x32xf32, #tpu.memory_space<vmem>>, vector<8x32xf32>
    %c0_1 = arith.constant 0 : index
    %c0_2 = arith.constant 0 : index
    %1 = vector.load %arg1[%c0_1, %c0_2] : memref<32x32xf32, #tpu.memory_space<vmem>>, vector<32x32xf32>
    %cst = arith.constant dense<0.000000e+00> : vector<8x32xf32>
    %2 = tpu.matmul %0, %1, %cst {dimension_numbers = #tpu.dot_dimension_numbers<[1], [0], [0], [1], [0, 0, 1, 1], [], []>} : vector<8x32xf32>, vector<32x32xf32>, vector<8x32xf32> -> vector<8x32xf32>
    %c0_3 = arith.constant 0 : index
    %c0_4 = arith.constant 0 : index
    %3 = vector.load %arg2[%c0_3, %c0_4] : memref<32x32xf32, #tpu.memory_space<vmem>>, vector<32x32xf32>
    %cst_5 = arith.constant dense<0.000000e+00> : vector<8x32xf32>
    %4 = tpu.matmul %0, %3, %cst_5 {dimension_numbers = #tpu.dot_dimension_numbers<[1], [0], [0], [1], [0, 0, 1, 1], [], []>} : vector<8x32xf32>, vector<32x32xf32>, vector<8x32xf32> -> vector<8x32xf32>
    %c0_6 = arith.constant 0 : index
    %c0_7 = arith.constant 0 : index
    %5 = vector.load %arg3[%c0_6, %c0_7] : memref<32x32xf32, #tpu.memory_space<vmem>>, vector<32x32xf32>
    %cst_8 = arith.constant dense<0.000000e+00> : vector<8x32xf32>
    %6 = tpu.matmul %0, %5, %cst_8 {dimension_numbers = #tpu.dot_dimension_numbers<[1], [0], [0], [1], [0, 0, 1, 1], [], []>} : vector<8x32xf32>, vector<32x32xf32>, vector<8x32xf32> -> vector<8x32xf32>
    %cst_9 = arith.constant 0.000000e+00 : f32
    %7 = vector.broadcast %cst_9 : f32 to vector<8x32xf32>
    %c0_10 = arith.constant 0 : index
    %c0_11 = arith.constant 0 : index
    %c0_12 = arith.constant 0 : index
    %8 = vector.load %arg4[%c0_10, %c0_11, %c0_12] : memref<4x1x32xf32, #tpu.memory_space<vmem>>, vector<1x1x32xf32>
    %9 = vector.shape_cast %8 : vector<1x1x32xf32> to vector<1x32xf32>
    %10 = vector.broadcast %9 : vector<1x32xf32> to vector<8x32xf32>
    %11 = arith.mulf %2, %10 : vector<8x32xf32>
    %cst_13 = arith.constant dense<0.000000e+00> : vector<8x8xf32>
    %12 = tpu.matmul %11, %4, %cst_13 {dimension_numbers = #tpu.dot_dimension_numbers<[1], [1], [0], [0], [0, 0, 1, 0], [], []>} : vector<8x32xf32>, vector<8x32xf32>, vector<8x8xf32> -> vector<8x8xf32>
    %cst_14 = arith.constant 0.353553385 : f32
    %13 = vector.broadcast %cst_14 : f32 to vector<8x8xf32>
    %14 = arith.mulf %12, %13 : vector<8x8xf32>
    %cst_15 = arith.constant dense<0xFF800000> : vector<8xf32>
    %15 = vector.multi_reduction <maximumf>, %14, %cst_15 [1] : vector<8x8xf32> to vector<8xf32>
    %16 = vector.shape_cast %15 : vector<8xf32> to vector<8x1xf32>
    %17 = vector.broadcast %16 : vector<8x1xf32> to vector<8x8xf32>
    %18 = arith.subf %14, %17 : vector<8x8xf32>
    %19 = math.exp %18 : vector<8x8xf32>
    %cst_16 = arith.constant dense<0.000000e+00> : vector<8xf32>
    %20 = vector.multi_reduction <add>, %19, %cst_16 [1] : vector<8x8xf32> to vector<8xf32>
    %21 = vector.shape_cast %20 : vector<8xf32> to vector<8x1xf32>
    %22 = tpu.reciprocal %21 {approx = true} : vector<8x1xf32> -> vector<8x1xf32>
    %23 = vector.broadcast %22 : vector<8x1xf32> to vector<8x8xf32>
    %24 = arith.mulf %19, %23 : vector<8x8xf32>
    %25 = vector.broadcast %9 : vector<1x32xf32> to vector<8x32xf32>
    %26 = arith.mulf %6, %25 : vector<8x32xf32>
    %cst_17 = arith.constant dense<0.000000e+00> : vector<8x32xf32>
    %27 = tpu.matmul %24, %26, %cst_17 {dimension_numbers = #tpu.dot_dimension_numbers<[1], [0], [0], [1], [0, 0, 1, 1], [], []>} : vector<8x8xf32>, vector<8x32xf32>, vector<8x32xf32> -> vector<8x32xf32>
    %28 = arith.addf %7, %27 : vector<8x32xf32>
    %c1 = arith.constant 1 : index
    %c0_18 = arith.constant 0 : index
    %c0_19 = arith.constant 0 : index
    %29 = vector.load %arg4[%c1, %c0_18, %c0_19] : memref<4x1x32xf32, #tpu.memory_space<vmem>>, vector<1x1x32xf32>
    %30 = vector.shape_cast %29 : vector<1x1x32xf32> to vector<1x32xf32>
    %31 = vector.broadcast %30 : vector<1x32xf32> to vector<8x32xf32>
    %32 = arith.mulf %2, %31 : vector<8x32xf32>
    %cst_20 = arith.constant dense<0.000000e+00> : vector<8x8xf32>
    %33 = tpu.matmul %32, %4, %cst_20 {dimension_numbers = #tpu.dot_dimension_numbers<[1], [1], [0], [0], [0, 0, 1, 0], [], []>} : vector<8x32xf32>, vector<8x32xf32>, vector<8x8xf32> -> vector<8x8xf32>
    %cst_21 = arith.constant 0.353553385 : f32
    %34 = vector.broadcast %cst_21 : f32 to vector<8x8xf32>
    %35 = arith.mulf %33, %34 : vector<8x8xf32>
    %cst_22 = arith.constant dense<0xFF800000> : vector<8xf32>
    %36 = vector.multi_reduction <maximumf>, %35, %cst_22 [1] : vector<8x8xf32> to vector<8xf32>
    %37 = vector.shape_cast %36 : vector<8xf32> to vector<8x1xf32>
    %38 = vector.broadcast %37 : vector<8x1xf32> to vector<8x8xf32>
    %39 = arith.subf %35, %38 : vector<8x8xf32>
    %40 = math.exp %39 : vector<8x8xf32>
    %cst_23 = arith.constant dense<0.000000e+00> : vector<8xf32>
    %41 = vector.multi_reduction <add>, %40, %cst_23 [1] : vector<8x8xf32> to vector<8xf32>
    %42 = vector.shape_cast %41 : vector<8xf32> to vector<8x1xf32>
    %43 = tpu.reciprocal %42 {approx = true} : vector<8x1xf32> -> vector<8x1xf32>
    %44 = vector.broadcast %43 : vector<8x1xf32> to vector<8x8xf32>
    %45 = arith.mulf %40, %44 : vector<8x8xf32>
    %46 = vector.broadcast %30 : vector<1x32xf32> to vector<8x32xf32>
    %47 = arith.mulf %6, %46 : vector<8x32xf32>
    %cst_24 = arith.constant dense<0.000000e+00> : vector<8x32xf32>
    %48 = tpu.matmul %45, %47, %cst_24 {dimension_numbers = #tpu.dot_dimension_numbers<[1], [0], [0], [1], [0, 0, 1, 1], [], []>} : vector<8x8xf32>, vector<8x32xf32>, vector<8x32xf32> -> vector<8x32xf32>
    %49 = arith.addf %28, %48 : vector<8x32xf32>
    %c2 = arith.constant 2 : index
    %c0_25 = arith.constant 0 : index
    %c0_26 = arith.constant 0 : index
    %50 = vector.load %arg4[%c2, %c0_25, %c0_26] : memref<4x1x32xf32, #tpu.memory_space<vmem>>, vector<1x1x32xf32>
    %51 = vector.shape_cast %50 : vector<1x1x32xf32> to vector<1x32xf32>
    %52 = vector.broadcast %51 : vector<1x32xf32> to vector<8x32xf32>
    %53 = arith.mulf %2, %52 : vector<8x32xf32>
    %cst_27 = arith.constant dense<0.000000e+00> : vector<8x8xf32>
    %54 = tpu.matmul %53, %4, %cst_27 {dimension_numbers = #tpu.dot_dimension_numbers<[1], [1], [0], [0], [0, 0, 1, 0], [], []>} : vector<8x32xf32>, vector<8x32xf32>, vector<8x8xf32> -> vector<8x8xf32>
    %cst_28 = arith.constant 0.353553385 : f32
    %55 = vector.broadcast %cst_28 : f32 to vector<8x8xf32>
    %56 = arith.mulf %54, %55 : vector<8x8xf32>
    %cst_29 = arith.constant dense<0xFF800000> : vector<8xf32>
    %57 = vector.multi_reduction <maximumf>, %56, %cst_29 [1] : vector<8x8xf32> to vector<8xf32>
    %58 = vector.shape_cast %57 : vector<8xf32> to vector<8x1xf32>
    %59 = vector.broadcast %58 : vector<8x1xf32> to vector<8x8xf32>
    %60 = arith.subf %56, %59 : vector<8x8xf32>
    %61 = math.exp %60 : vector<8x8xf32>
    %cst_30 = arith.constant dense<0.000000e+00> : vector<8xf32>
    %62 = vector.multi_reduction <add>, %61, %cst_30 [1] : vector<8x8xf32> to vector<8xf32>
    %63 = vector.shape_cast %62 : vector<8xf32> to vector<8x1xf32>
    %64 = tpu.reciprocal %63 {approx = true} : vector<8x1xf32> -> vector<8x1xf32>
    %65 = vector.broadcast %64 : vector<8x1xf32> to vector<8x8xf32>
    %66 = arith.mulf %61, %65 : vector<8x8xf32>
    %67 = vector.broadcast %51 : vector<1x32xf32> to vector<8x32xf32>
    %68 = arith.mulf %6, %67 : vector<8x32xf32>
    %cst_31 = arith.constant dense<0.000000e+00> : vector<8x32xf32>
    %69 = tpu.matmul %66, %68, %cst_31 {dimension_numbers = #tpu.dot_dimension_numbers<[1], [0], [0], [1], [0, 0, 1, 1], [], []>} : vector<8x8xf32>, vector<8x32xf32>, vector<8x32xf32> -> vector<8x32xf32>
    %70 = arith.addf %49, %69 : vector<8x32xf32>
    %c3 = arith.constant 3 : index
    %c0_32 = arith.constant 0 : index
    %c0_33 = arith.constant 0 : index
    %71 = vector.load %arg4[%c3, %c0_32, %c0_33] : memref<4x1x32xf32, #tpu.memory_space<vmem>>, vector<1x1x32xf32>
    %72 = vector.shape_cast %71 : vector<1x1x32xf32> to vector<1x32xf32>
    %73 = vector.broadcast %72 : vector<1x32xf32> to vector<8x32xf32>
    %74 = arith.mulf %2, %73 : vector<8x32xf32>
    %cst_34 = arith.constant dense<0.000000e+00> : vector<8x8xf32>
    %75 = tpu.matmul %74, %4, %cst_34 {dimension_numbers = #tpu.dot_dimension_numbers<[1], [1], [0], [0], [0, 0, 1, 0], [], []>} : vector<8x32xf32>, vector<8x32xf32>, vector<8x8xf32> -> vector<8x8xf32>
    %cst_35 = arith.constant 0.353553385 : f32
    %76 = vector.broadcast %cst_35 : f32 to vector<8x8xf32>
    %77 = arith.mulf %75, %76 : vector<8x8xf32>
    %cst_36 = arith.constant dense<0xFF800000> : vector<8xf32>
    %78 = vector.multi_reduction <maximumf>, %77, %cst_36 [1] : vector<8x8xf32> to vector<8xf32>
    %79 = vector.shape_cast %78 : vector<8xf32> to vector<8x1xf32>
    %80 = vector.broadcast %79 : vector<8x1xf32> to vector<8x8xf32>
    %81 = arith.subf %77, %80 : vector<8x8xf32>
    %82 = math.exp %81 : vector<8x8xf32>
    %cst_37 = arith.constant dense<0.000000e+00> : vector<8xf32>
    %83 = vector.multi_reduction <add>, %82, %cst_37 [1] : vector<8x8xf32> to vector<8xf32>
    %84 = vector.shape_cast %83 : vector<8xf32> to vector<8x1xf32>
    %85 = tpu.reciprocal %84 {approx = true} : vector<8x1xf32> -> vector<8x1xf32>
    %86 = vector.broadcast %85 : vector<8x1xf32> to vector<8x8xf32>
    %87 = arith.mulf %82, %86 : vector<8x8xf32>
    %88 = vector.broadcast %72 : vector<1x32xf32> to vector<8x32xf32>
    %89 = arith.mulf %6, %88 : vector<8x32xf32>
    %cst_38 = arith.constant dense<0.000000e+00> : vector<8x32xf32>
    %90 = tpu.matmul %87, %89, %cst_38 {dimension_numbers = #tpu.dot_dimension_numbers<[1], [0], [0], [1], [0, 0, 1, 1], [], []>} : vector<8x8xf32>, vector<8x32xf32>, vector<8x32xf32> -> vector<8x32xf32>
    %91 = arith.addf %70, %90 : vector<8x32xf32>
    %cst_39 = arith.constant 0.000000e+00 : f32
    %92 = vector.broadcast %cst_39 : f32 to vector<8x32xf32>
    %c0_40 = arith.constant 0 : index
    %c0_41 = arith.constant 0 : index
    %c0_42 = arith.constant 0 : index
    %93 = vector.load %arg5[%c0_40, %c0_41, %c0_42] : memref<4x8x32xf32, #tpu.memory_space<vmem>>, vector<1x8x32xf32>
    %94 = vector.shape_cast %93 : vector<1x8x32xf32> to vector<8x32xf32>
    %cst_43 = arith.constant dense<0.000000e+00> : vector<8x8xf32>
    %95 = tpu.matmul %94, %91, %cst_43 {dimension_numbers = #tpu.dot_dimension_numbers<[1], [1], [0], [0], [0, 0, 1, 0], [], []>} : vector<8x32xf32>, vector<8x32xf32>, vector<8x8xf32> -> vector<8x8xf32>
    %c0_44 = arith.constant 0 : index
    %c0_45 = arith.constant 0 : index
    %c0_46 = arith.constant 0 : index
    %96 = vector.load %arg6[%c0_44, %c0_45, %c0_46] : memref<4x8x32xf32, #tpu.memory_space<vmem>>, vector<1x8x32xf32>
    %97 = vector.shape_cast %96 : vector<1x8x32xf32> to vector<8x32xf32>
    %cst_47 = arith.constant dense<0.000000e+00> : vector<8x32xf32>
    %98 = tpu.matmul %95, %97, %cst_47 {dimension_numbers = #tpu.dot_dimension_numbers<[1], [0], [0], [1], [0, 0, 1, 1], [], []>} : vector<8x8xf32>, vector<8x32xf32>, vector<8x32xf32> -> vector<8x32xf32>
    %99 = arith.addf %92, %98 : vector<8x32xf32>
    %c1_48 = arith.constant 1 : index
    %c0_49 = arith.constant 0 : index
    %c0_50 = arith.constant 0 : index
    %100 = vector.load %arg5[%c1_48, %c0_49, %c0_50] : memref<4x8x32xf32, #tpu.memory_space<vmem>>, vector<1x8x32xf32>
    %101 = vector.shape_cast %100 : vector<1x8x32xf32> to vector<8x32xf32>
    %cst_51 = arith.constant dense<0.000000e+00> : vector<8x8xf32>
    %102 = tpu.matmul %101, %91, %cst_51 {dimension_numbers = #tpu.dot_dimension_numbers<[1], [1], [0], [0], [0, 0, 1, 0], [], []>} : vector<8x32xf32>, vector<8x32xf32>, vector<8x8xf32> -> vector<8x8xf32>
    %c1_52 = arith.constant 1 : index
    %c0_53 = arith.constant 0 : index
    %c0_54 = arith.constant 0 : index
    %103 = vector.load %arg6[%c1_52, %c0_53, %c0_54] : memref<4x8x32xf32, #tpu.memory_space<vmem>>, vector<1x8x32xf32>
    %104 = vector.shape_cast %103 : vector<1x8x32xf32> to vector<8x32xf32>
    %cst_55 = arith.constant dense<0.000000e+00> : vector<8x32xf32>
    %105 = tpu.matmul %102, %104, %cst_55 {dimension_numbers = #tpu.dot_dimension_numbers<[1], [0], [0], [1], [0, 0, 1, 1], [], []>} : vector<8x8xf32>, vector<8x32xf32>, vector<8x32xf32> -> vector<8x32xf32>
    %106 = arith.addf %99, %105 : vector<8x32xf32>
    %c2_56 = arith.constant 2 : index
    %c0_57 = arith.constant 0 : index
    %c0_58 = arith.constant 0 : index
    %107 = vector.load %arg5[%c2_56, %c0_57, %c0_58] : memref<4x8x32xf32, #tpu.memory_space<vmem>>, vector<1x8x32xf32>
    %108 = vector.shape_cast %107 : vector<1x8x32xf32> to vector<8x32xf32>
    %cst_59 = arith.constant dense<0.000000e+00> : vector<8x8xf32>
    %109 = tpu.matmul %108, %91, %cst_59 {dimension_numbers = #tpu.dot_dimension_numbers<[1], [1], [0], [0], [0, 0, 1, 0], [], []>} : vector<8x32xf32>, vector<8x32xf32>, vector<8x8xf32> -> vector<8x8xf32>
    %c2_60 = arith.constant 2 : index
    %c0_61 = arith.constant 0 : index
    %c0_62 = arith.constant 0 : index
    %110 = vector.load %arg6[%c2_60, %c0_61, %c0_62] : memref<4x8x32xf32, #tpu.memory_space<vmem>>, vector<1x8x32xf32>
    %111 = vector.shape_cast %110 : vector<1x8x32xf32> to vector<8x32xf32>
    %cst_63 = arith.constant dense<0.000000e+00> : vector<8x32xf32>
    %112 = tpu.matmul %109, %111, %cst_63 {dimension_numbers = #tpu.dot_dimension_numbers<[1], [0], [0], [1], [0, 0, 1, 1], [], []>} : vector<8x8xf32>, vector<8x32xf32>, vector<8x32xf32> -> vector<8x32xf32>
    %113 = arith.addf %106, %112 : vector<8x32xf32>
    %c3_64 = arith.constant 3 : index
    %c0_65 = arith.constant 0 : index
    %c0_66 = arith.constant 0 : index
    %114 = vector.load %arg5[%c3_64, %c0_65, %c0_66] : memref<4x8x32xf32, #tpu.memory_space<vmem>>, vector<1x8x32xf32>
    %115 = vector.shape_cast %114 : vector<1x8x32xf32> to vector<8x32xf32>
    %cst_67 = arith.constant dense<0.000000e+00> : vector<8x8xf32>
    %116 = tpu.matmul %115, %91, %cst_67 {dimension_numbers = #tpu.dot_dimension_numbers<[1], [1], [0], [0], [0, 0, 1, 0], [], []>} : vector<8x32xf32>, vector<8x32xf32>, vector<8x8xf32> -> vector<8x8xf32>
    %c3_68 = arith.constant 3 : index
    %c0_69 = arith.constant 0 : index
    %c0_70 = arith.constant 0 : index
    %117 = vector.load %arg6[%c3_68, %c0_69, %c0_70] : memref<4x8x32xf32, #tpu.memory_space<vmem>>, vector<1x8x32xf32>
    %118 = vector.shape_cast %117 : vector<1x8x32xf32> to vector<8x32xf32>
    %cst_71 = arith.constant dense<0.000000e+00> : vector<8x32xf32>
    %119 = tpu.matmul %116, %118, %cst_71 {dimension_numbers = #tpu.dot_dimension_numbers<[1], [0], [0], [1], [0, 0, 1, 1], [], []>} : vector<8x8xf32>, vector<8x32xf32>, vector<8x32xf32> -> vector<8x32xf32>
    %120 = arith.addf %113, %119 : vector<8x32xf32>
    %121 = arith.addf %120, %0 : vector<8x32xf32>
    %c0_72 = arith.constant 0 : index
    %c0_73 = arith.constant 0 : index
    %122 = vector.load %arg9[%c0_72, %c0_73] : memref<1x32xf32, #tpu.memory_space<vmem>>, vector<1x32xf32>
    %c0_74 = arith.constant 0 : index
    %c0_75 = arith.constant 0 : index
    %123 = vector.load %arg10[%c0_74, %c0_75] : memref<1x32xf32, #tpu.memory_space<vmem>>, vector<1x32xf32>
    %cst_76 = arith.constant dense<0.000000e+00> : vector<8xf32>
    %124 = vector.multi_reduction <add>, %121, %cst_76 [1] : vector<8x32xf32> to vector<8xf32>
    %125 = vector.shape_cast %124 : vector<8xf32> to vector<8x1xf32>
    %cst_77 = arith.constant 3.200000e+01 : f32
    %126 = vector.broadcast %cst_77 : f32 to vector<8x1xf32>
    %127 = arith.divf %125, %126 : vector<8x1xf32>
    %128 = vector.broadcast %127 : vector<8x1xf32> to vector<8x32xf32>
    %129 = arith.subf %121, %128 : vector<8x32xf32>
    %130 = vector.broadcast %127 : vector<8x1xf32> to vector<8x32xf32>
    %131 = arith.subf %121, %130 : vector<8x32xf32>
    %132 = arith.mulf %129, %131 : vector<8x32xf32>
    %cst_78 = arith.constant dense<0.000000e+00> : vector<8xf32>
    %133 = vector.multi_reduction <add>, %132, %cst_78 [1] : vector<8x32xf32> to vector<8xf32>
    %134 = vector.shape_cast %133 : vector<8xf32> to vector<8x1xf32>
    %cst_79 = arith.constant 3.200000e+01 : f32
    %135 = vector.broadcast %cst_79 : f32 to vector<8x1xf32>
    %136 = arith.divf %134, %135 : vector<8x1xf32>
    %137 = vector.broadcast %127 : vector<8x1xf32> to vector<8x32xf32>
    %138 = arith.subf %121, %137 : vector<8x32xf32>
    %cst_80 = arith.constant 9.99999974E-6 : f32
    %139 = vector.broadcast %cst_80 : f32 to vector<8x1xf32>
    %140 = arith.addf %136, %139 : vector<8x1xf32>
    %141 = math.rsqrt %140 : vector<8x1xf32>
    %142 = vector.broadcast %141 : vector<8x1xf32> to vector<8x32xf32>
    %143 = arith.mulf %138, %142 : vector<8x32xf32>
    %144 = vector.broadcast %122 : vector<1x32xf32> to vector<8x32xf32>
    %145 = arith.mulf %143, %144 : vector<8x32xf32>
    %146 = vector.broadcast %123 : vector<1x32xf32> to vector<8x32xf32>
    %147 = arith.addf %145, %146 : vector<8x32xf32>
    %c0_81 = arith.constant 0 : index
    %c0_82 = arith.constant 0 : index
    %148 = vector.load %arg7[%c0_81, %c0_82] : memref<32x32xf32, #tpu.memory_space<vmem>>, vector<32x32xf32>
    %cst_83 = arith.constant dense<0.000000e+00> : vector<8x32xf32>
    %149 = tpu.matmul %147, %148, %cst_83 {dimension_numbers = #tpu.dot_dimension_numbers<[1], [0], [0], [1], [0, 0, 1, 1], [], []>} : vector<8x32xf32>, vector<32x32xf32>, vector<8x32xf32> -> vector<8x32xf32>
    %c0_84 = arith.constant 0 : index
    %c0_85 = arith.constant 0 : index
    %150 = vector.load %arg8[%c0_84, %c0_85] : memref<1x32xf32, #tpu.memory_space<vmem>>, vector<1x32xf32>
    %151 = vector.broadcast %150 : vector<1x32xf32> to vector<8x32xf32>
    %152 = arith.addf %149, %151 : vector<8x32xf32>
    %153 = arith.addf %152, %147 : vector<8x32xf32>
    %c0_86 = arith.constant 0 : index
    %c0_87 = arith.constant 0 : index
    %154 = vector.load %arg11[%c0_86, %c0_87] : memref<1x32xf32, #tpu.memory_space<vmem>>, vector<1x32xf32>
    %c0_88 = arith.constant 0 : index
    %c0_89 = arith.constant 0 : index
    %155 = vector.load %arg12[%c0_88, %c0_89] : memref<1x32xf32, #tpu.memory_space<vmem>>, vector<1x32xf32>
    %cst_90 = arith.constant dense<0.000000e+00> : vector<8xf32>
    %156 = vector.multi_reduction <add>, %153, %cst_90 [1] : vector<8x32xf32> to vector<8xf32>
    %157 = vector.shape_cast %156 : vector<8xf32> to vector<8x1xf32>
    %cst_91 = arith.constant 3.200000e+01 : f32
    %158 = vector.broadcast %cst_91 : f32 to vector<8x1xf32>
    %159 = arith.divf %157, %158 : vector<8x1xf32>
    %160 = vector.broadcast %159 : vector<8x1xf32> to vector<8x32xf32>
    %161 = arith.subf %153, %160 : vector<8x32xf32>
    %162 = vector.broadcast %159 : vector<8x1xf32> to vector<8x32xf32>
    %163 = arith.subf %153, %162 : vector<8x32xf32>
    %164 = arith.mulf %161, %163 : vector<8x32xf32>
    %cst_92 = arith.constant dense<0.000000e+00> : vector<8xf32>
    %165 = vector.multi_reduction <add>, %164, %cst_92 [1] : vector<8x32xf32> to vector<8xf32>
    %166 = vector.shape_cast %165 : vector<8xf32> to vector<8x1xf32>
    %cst_93 = arith.constant 3.200000e+01 : f32
    %167 = vector.broadcast %cst_93 : f32 to vector<8x1xf32>
    %168 = arith.divf %166, %167 : vector<8x1xf32>
    %169 = vector.broadcast %159 : vector<8x1xf32> to vector<8x32xf32>
    %170 = arith.subf %153, %169 : vector<8x32xf32>
    %cst_94 = arith.constant 9.99999974E-6 : f32
    %171 = vector.broadcast %cst_94 : f32 to vector<8x1xf32>
    %172 = arith.addf %168, %171 : vector<8x1xf32>
    %173 = math.rsqrt %172 : vector<8x1xf32>
    %174 = vector.broadcast %173 : vector<8x1xf32> to vector<8x32xf32>
    %175 = arith.mulf %170, %174 : vector<8x32xf32>
    %176 = vector.broadcast %154 : vector<1x32xf32> to vector<8x32xf32>
    %177 = arith.mulf %175, %176 : vector<8x32xf32>
    %178 = vector.broadcast %155 : vector<1x32xf32> to vector<8x32xf32>
    %179 = arith.addf %177, %178 : vector<8x32xf32>
    %c0_95 = arith.constant 0 : index
    %c0_96 = arith.constant 0 : index
    %180 = vector.load %arg13[%c0_95, %c0_96] : memref<8x32xf32, #tpu.memory_space<vmem>>, vector<8x32xf32>
    tpu.vector_store %arg13[%c0_95, %c0_96], %179 {strides = array<i32>} : memref<8x32xf32, #tpu.memory_space<vmem>>, vector<8x32xf32>,
    return
  }
}

</mosaic_0001>

<llo_original>
// kernel: tpu_custom_call.1
$region0: #{tpu_custom_call.1}
  #allocation0 [shape = 'u32[]', space=smem, size = 0x4, offset = 0x4, fixed_abs, tag = 'smem constant byte address 0x4 - core index']
  #allocation1 [shape = 'u32[144,128]{1,0:T(1,128)}', space=vmem, size = 0x12000, scoped, tag = 'internal scratch']
  %s0 = inlined_call_operand.hbm [shape: f32[8,32], index: 0, kind: input, shape index: {}]
  %s1 = inlined_call_operand.hbm [shape: f32[32,32], index: 1, kind: input, shape index: {}]
  %s2 = inlined_call_operand.hbm [shape: f32[32,32], index: 2, kind: input, shape index: {}]
  %s3 = inlined_call_operand.hbm [shape: f32[32,32], index: 3, kind: input, shape index: {}]
  %s4 = inlined_call_operand.vmem [shape: f32[4,1,32], index: 4, kind: input, shape index: {}]
  %s5 = inlined_call_operand.hbm [shape: f32[4,8,32], index: 5, kind: input, shape index: {}]
  %s6 = inlined_call_operand.hbm [shape: f32[4,8,32], index: 6, kind: input, shape index: {}]
  %s7 = inlined_call_operand.hbm [shape: f32[32,32], index: 7, kind: input, shape index: {}]
  %s8 = inlined_call_operand.vmem [shape: f32[1,32], index: 8, kind: input, shape index: {}]
  %s9 = inlined_call_operand.vmem [shape: f32[1,32], index: 9, kind: input, shape index: {}]
  %s10 = inlined_call_operand.vmem [shape: f32[1,32], index: 10, kind: input, shape index: {}]
  %s11 = inlined_call_operand.vmem [shape: f32[1,32], index: 11, kind: input, shape index: {}]
  %s12 = inlined_call_operand.vmem [shape: f32[1,32], index: 12, kind: input, shape index: {}]
  %s13 = inlined_call_operand.hbm [shape: f32[8,32], index: 13, kind: output, shape index: {}]
  %s14 = sld [smem:[#allocation0]]
  $region90: #{tpu_custom_call.1} parent=0
    _
  %s16 = ssub.s32 1, %s14
  %s17 = scalar_select 0, %s16, %s14
  $region1: #{tpu_custom_call.1} parent=0
    #allocation2 [shape = 'u8[4096]{0}', space=vmem, size = 0x1000, scoped, tag = 'input window, operand 0, single buffered']
    #allocation3 [shape = 's32[1]{0}', space=sflag, size = 0x4, scoped, tag = 'scoped memory for tpu_custom_call.1']
    #allocation4 [shape = 's32[1]{0}', space=sflag, size = 0x4, scoped, tag = 'scoped memory for tpu_custom_call.1']
    #allocation5 [shape = 'u8[16384]{0}', space=vmem, size = 0x4000, scoped, tag = 'input window, operand 1, single buffered']
    #allocation6 [shape = 's32[1]{0}', space=sflag, size = 0x4, scoped, tag = 'scoped memory for tpu_custom_call.1']
    #allocation7 [shape = 'u8[16384]{0}', space=vmem, size = 0x4000, scoped, tag = 'input window, operand 2, single buffered']
    #allocation8 [shape = 'u8[16384]{0}', space=vmem, size = 0x4000, scoped, tag = 'input window, operand 3, single buffered']
    #allocation9 [shape = 's32[1]{0}', space=sflag, size = 0x4, scoped, tag = 'scoped memory for tpu_custom_call.1']
    #allocation10 [shape = 'u8[16384]{0}', space=vmem, size = 0x4000, scoped, tag = 'input window, operand 5, single buffered']
    #allocation11 [shape = 'u8[16384]{0}', space=vmem, size = 0x4000, scoped, tag = 'input window, operand 6, single buffered']
    #allocation12 [shape = 's32[1]{0}', space=sflag, size = 0x4, scoped, tag = 'scoped memory for tpu_custom_call.1']
    #allocation13 [shape = 'u8[16384]{0}', space=vmem, size = 0x4000, scoped, tag = 'input window, operand 7, single buffered']
    #allocation14 [shape = 'u8[4096]{0}', space=vmem, size = 0x1000, scoped, tag = 'output window, operand 0, single buffered']
    %18 = vsyncpa [#allocation3], 0
    %19 = vsyncpa [#allocation6], 0
    %20 = vsyncpa [#allocation9], 0
    %21 = vsyncpa [#allocation12], 0
    %22 = vsyncpa [#allocation4], 0
    // Predicated region
    $region2: #{tpu_custom_call.1} parent=1 // pred_check
      _
    $region3: #{tpu_custom_call.1} parent=1 // pred_check_branch
      %24 = sbr.rel (0) target = $region5
    $region4: #{tpu_custom_call.1} parent=1 // pred_region
      %s26 = ssub.s32 128, 128
      %27 = vsyncadd [#allocation3], %s26
      %s29 = sshll.u32 [#allocation2], 4
      %s30 = int_to_ptr.vmem [resolvable:$true] %s29
      %32 = dma.hbm_to_vmem [thread:$0]  %s0, 128, %s30, [#allocation3]
    $region5: #{tpu_custom_call.1} parent=1 // pred_fallthru
      _
    // Predicated region
    $region6: #{tpu_custom_call.1} parent=1 // pred_check
      _
    $region7: #{tpu_custom_call.1} parent=1 // pred_check_branch
      %34 = sbr.rel (0) target = $region9
    $region8: #{tpu_custom_call.1} parent=1 // pred_region
      %s36 = ssub.s32 512, 512
      %37 = vsyncadd [#allocation6], %s36
      %s38 = sshll.u32 [#allocation5], 4
      %s39 = int_to_ptr.vmem [resolvable:$true] %s38
      %44 = dma.hbm_to_vmem [thread:$0]  %s1, 512, %s39, [#allocation6], 128, 128, 8
    $region9: #{tpu_custom_call.1} parent=1 // pred_fallthru
      _
    // Predicated region
    $region10: #{tpu_custom_call.1} parent=1 // pred_check
      _
    $region11: #{tpu_custom_call.1} parent=1 // pred_check_branch
      %46 = sbr.rel (0) target = $region13
    $region12: #{tpu_custom_call.1} parent=1 // pred_region
      %s48 = ssub.s32 512, 512
      %49 = vsyncadd [#allocation6], %s48
      %s50 = sshll.u32 [#allocation7], 4
      %s51 = int_to_ptr.vmem [resolvable:$true] %s50
      %56 = dma.hbm_to_vmem [thread:$0]  %s2, 512, %s51, [#allocation6], 128, 128, 8
    $region13: #{tpu_custom_call.1} parent=1 // pred_fallthru
      _
    // Predicated region
    $region14: #{tpu_custom_call.1} parent=1 // pred_check
      _
    $region15: #{tpu_custom_call.1} parent=1 // pred_check_branch
      %58 = sbr.rel (0) target = $region17
    $region16: #{tpu_custom_call.1} parent=1 // pred_region
      %s60 = ssub.s32 512, 512
      %61 = vsyncadd [#allocation9], %s60
      %s62 = sshll.u32 [#allocation8], 4
      %s63 = int_to_ptr.vmem [resolvable:$true] %s62
      %68 = dma.hbm_to_vmem [thread:$0]  %s3, 512, %s63, [#allocation9], 128, 128, 8
    $region17: #{tpu_custom_call.1} parent=1 // pred_fallthru
      _
    // Predicated region
    $region18: #{tpu_custom_call.1} parent=1 // pred_check
      _
    $region19: #{tpu_custom_call.1} parent=1 // pred_check_branch
      %70 = sbr.rel (0) target = $region21
    $region20: #{tpu_custom_call.1} parent=1 // pred_region
      _
    $region21: #{tpu_custom_call.1} parent=1 // pred_fallthru
      _
    // Predicated region
    $region22: #{tpu_custom_call.1} parent=1 // pred_check
      _
    $region23: #{tpu_custom_call.1} parent=1 // pred_check_branch
      %72 = sbr.rel (0) target = $region25
    $region24: #{tpu_custom_call.1} parent=1 // pred_region
      %s74 = ssub.s32 512, 512
      %75 = vsyncadd [#allocation9], %s74
      %s76 = sshll.u32 [#allocation10], 4
      %s77 = int_to_ptr.vmem [resolvable:$true] %s76
      %82 = dma.hbm_to_vmem [thread:$0]  %s5, 512, %s77, [#allocation9], 128, 128, 8
    $region25: #{tpu_custom_call.1} parent=1 // pred_fallthru
      _
    // Predicated region
    $region26: #{tpu_custom_call.1} parent=1 // pred_check
      _
    $region27: #{tpu_custom_call.1} parent=1 // pred_check_branch
      %84 = sbr.rel (0) target = $region29
    $region28: #{tpu_custom_call.1} parent=1 // pred_region
      %s86 = ssub.s32 512, 512
      %87 = vsyncadd [#allocation12], %s86
      %s88 = sshll.u32 [#allocation11], 4
      %s89 = int_to_ptr.vmem [resolvable:$true] %s88
      %94 = dma.hbm_to_vmem [thread:$0]  %s6, 512, %s89, [#allocation12], 128, 128, 8
    $region29: #{tpu_custom_call.1} parent=1 // pred_fallthru
      _
    // Predicated region
    $region30: #{tpu_custom_call.1} parent=1 // pred_check
      _
    $region31: #{tpu_custom_call.1} parent=1 // pred_check_branch
      %96 = sbr.rel (0) target = $region33
    $region32: #{tpu_custom_call.1} parent=1 // pred_region
      %s98 = ssub.s32 512, 512
      %99 = vsyncadd [#allocation12], %s98
      %s100 = sshll.u32 [#allocation13], 4
      %s101 = int_to_ptr.vmem [resolvable:$true] %s100
      %106 = dma.hbm_to_vmem [thread:$0]  %s7, 512, %s101, [#allocation12], 128, 128, 8
    $region33: #{tpu_custom_call.1} parent=1 // pred_fallthru
      _
    // Predicated region
    $region34: #{tpu_custom_call.1} parent=1 // pred_check
      _
    $region35: #{tpu_custom_call.1} parent=1 // pred_check_branch
      %108 = sbr.rel (0) target = $region37
    $region36: #{tpu_custom_call.1} parent=1 // pred_region
      _
    $region37: #{tpu_custom_call.1} parent=1 // pred_fallthru
      _
    // Predicated region
    $region38: #{tpu_custom_call.1} parent=1 // pred_check
      _
    $region39: #{tpu_custom_call.1} parent=1 // pred_check_branch
      %110 = sbr.rel (0) target = $region41
    $region40: #{tpu_custom_call.1} parent=1 // pred_region
      _
    $region41: #{tpu_custom_call.1} parent=1 // pred_fallthru
      _
    // Predicated region
    $region42: #{tpu_custom_call.1} parent=1 // pred_check
      _
    $region43: #{tpu_custom_call.1} parent=1 // pred_check_branch
      %112 = sbr.rel (0) target = $region45
    $region44: #{tpu_custom_call.1} parent=1 // pred_region
      _
    $region45: #{tpu_custom_call.1} parent=1 // pred_fallthru
      _
    // Predicated region
    $region46: #{tpu_custom_call.1} parent=1 // pred_check
      _
    $region47: #{tpu_custom_call.1} parent=1 // pred_check_branch
      %114 = sbr.rel (0) target = $region49
    $region48: #{tpu_custom_call.1} parent=1 // pred_region
      _
    $region49: #{tpu_custom_call.1} parent=1 // pred_fallthru
      _
    // Predicated region
    $region50: #{tpu_custom_call.1} parent=1 // pred_check
      _
    $region51: #{tpu_custom_call.1} parent=1 // pred_check_branch
      %116 = sbr.rel (0) target = $region53
    $region52: #{tpu_custom_call.1} parent=1 // pred_region
      _
    $region53: #{tpu_custom_call.1} parent=1 // pred_fallthru
      _
    // Predicated region
    $region54: #{tpu_custom_call.1} parent=1 // pred_check
      _
    $region55: #{tpu_custom_call.1} parent=1 // pred_check_branch
      %118 = sbr.rel (0) target = $region57
    $region56: #{tpu_custom_call.1} parent=1 // pred_region
      %119 = dma.done [#allocation3], 128
    $region57: #{tpu_custom_call.1} parent=1 // pred_fallthru
      _
    // Predicated region
    $region58: #{tpu_custom_call.1} parent=1 // pred_check
      _
    $region59: #{tpu_custom_call.1} parent=1 // pred_check_branch
      %121 = sbr.rel (0) target = $region61
    $region60: #{tpu_custom_call.1} parent=1 // pred_region
      %122 = dma.done [#allocation6], 512
    $region61: #{tpu_custom_call.1} parent=1 // pred_fallthru
      _
    // Predicated region
    $region62: #{tpu_custom_call.1} parent=1 // pred_check
      _
    $region63: #{tpu_custom_call.1} parent=1 // pred_check_branch
      %124 = sbr.rel (0) target = $region65
    $region64: #{tpu_custom_call.1} parent=1 // pred_region
      %125 = dma.done [#allocation6], 512
    $region65: #{tpu_custom_call.1} parent=1 // pred_fallthru
      _
    // Predicated region
    $region66: #{tpu_custom_call.1} parent=1 // pred_check
      _
    $region67: #{tpu_custom_call.1} parent=1 // pred_check_branch
      %127 = sbr.rel (0) target = $region69
    $region68: #{tpu_custom_call.1} parent=1 // pred_region
      %128 = dma.done [#allocation9], 512
    $region69: #{tpu_custom_call.1} parent=1 // pred_fallthru
      _
    // Predicated region
    $region70: #{tpu_custom_call.1} parent=1 // pred_check
      _
    $region71: #{tpu_custom_call.1} parent=1 // pred_check_branch
      %130 = sbr.rel (0) target = $region73
    $region72: #{tpu_custom_call.1} parent=1 // pred_region
      %131 = dma.done [#allocation9], 512
    $region73: #{tpu_custom_call.1} parent=1 // pred_fallthru
      _
    // Predicated region
    $region74: #{tpu_custom_call.1} parent=1 // pred_check
      _
    $region75: #{tpu_custom_call.1} parent=1 // pred_check_branch
      %133 = sbr.rel (0) target = $region77
    $region76: #{tpu_custom_call.1} parent=1 // pred_region
      %134 = dma.done [#allocation12], 512
    $region77: #{tpu_custom_call.1} parent=1 // pred_fallthru
      _
    // Predicated region
    $region78: #{tpu_custom_call.1} parent=1 // pred_check
      _
    $region79: #{tpu_custom_call.1} parent=1 // pred_check_branch
      %136 = sbr.rel (0) target = $region81
    $region80: #{tpu_custom_call.1} parent=1 // pred_region
      %137 = dma.done [#allocation12], 512
    $region81: #{tpu_custom_call.1} parent=1 // pred_fallthru
      _
    %v138 = vld [vmem:[#allocation2] sm:$0xff]
    %v139 = vld [vmem:[#allocation5] sm:$0xff]
    %v140 = vld [vmem:[#allocation5 + $0x8] sm:$0xff]
    %v141 = vld [vmem:[#allocation5 + $0x10] sm:$0xff]
    %v142 = vld [vmem:[#allocation5 + $0x18] sm:$0xff]
    %vm143 = vcmask 261120
    %v145 = vsel %vm143, %v138, 0
    %147 = vmatprep.subr.mxu0 0.0
    %148 = vmatpush1.msra.mxu0 %v139
    %149 = vmatprep.subr.mxu0 0.0
    %150 = vmatpush1.msra.mxu0 %v140
    %151 = vmatprep.subr.mxu0 0.0
    %152 = vmatpush1.msra.mxu0 %v141
    %153 = vmatprep.subr.mxu0 0.0
    %154 = vmatpush1.msra.mxu0 %v142
    %155 = vmatprep.subr.mxu0 0.0
    %156 = vmatpush1.msra.mxu0 0.0
    %157 = vmatprep.subr.mxu0 0.0
    %158 = vmatpush1.msra.mxu0 0.0
    %159 = vmatprep.subr.mxu0 0.0
    %160 = vmatpush1.msra.mxu0 0.0
    %161 = vmatprep.subr.mxu0 0.0
    %162 = vmatpush1.msra.mxu0 0.0
    %163 = vmatprep.subr.mxu0 0.0
    %164 = vmatpush1.msra.mxu0 0.0
    %165 = vmatprep.subr.mxu0 0.0
    %166 = vmatpush1.msra.mxu0 0.0
    %167 = vmatprep.subr.mxu0 0.0
    %168 = vmatpush1.msra.mxu0 0.0
    %169 = vmatprep.subr.mxu0 0.0
    %170 = vmatpush1.msra.mxu0 0.0
    %171 = vmatprep.subr.mxu0 0.0
    %172 = vmatpush1.msra.mxu0 0.0
    %173 = vmatprep.subr.mxu0 0.0
    %174 = vmatpush1.msra.mxu0 0.0
    %175 = vmatprep.subr.mxu0 0.0
    %176 = vmatpush1.msra.mxu0 0.0
    %177 = vmatprep.subr.mxu0 0.0
    %178 = vmatpush1.msra.mxu0 0.0
    %179 = vmatprep.subr.mxu0 0.0
    %180 = vmatpush1.msra.mxu0 0.0
    %181 = vmatprep.subr.mxu0 0.0
    %182 = vmatpush1.msra.mxu0 0.0
    %183 = vmatprep.subr.mxu0 0.0
    %184 = vmatpush1.msra.mxu0 0.0
    %185 = vmatprep.subr.mxu0 0.0
    %186 = vmatpush1.msra.mxu0 0.0
    %187 = vmatprep.subr.mxu0 0.0
    %188 = vmatpush1.msra.mxu0 0.0
    %189 = vmatprep.subr.mxu0 0.0
    %190 = vmatpush1.msra.mxu0 0.0
    %191 = vmatprep.subr.mxu0 0.0
    %192 = vmatpush1.msra.mxu0 0.0
    %193 = vmatprep.subr.mxu0 0.0
    %194 = vmatpush1.msra.mxu0 0.0
    %195 = vmatprep.subr.mxu0 0.0
    %196 = vmatpush1.msra.mxu0 0.0
    %197 = vmatprep.subr.mxu0 0.0
    %198 = vmatpush1.msra.mxu0 0.0
    %199 = vmatprep.subr.mxu0 0.0
    %200 = vmatpush1.msra.mxu0 0.0
    %201 = vmatprep.subr.mxu0 0.0
    %202 = vmatpush1.msra.mxu0 0.0
    %203 = vmatprep.subr.mxu0 0.0
    %204 = vmatpush1.msra.mxu0 0.0
    %205 = vmatprep.subr.mxu0 0.0
    %206 = vmatpush1.msra.mxu0 0.0
    %207 = vmatprep.subr.mxu0 0.0
    %208 = vmatpush1.msra.mxu0 0.0
    %209 = vmatprep.subr.mxu0 0.0
    %210 = vmatpush1.msra.mxu0 0.0
    %211 = vmatprep.mubr.f32.mxu0 0.0
    %212 = vmatmul.mubr.f32.gmra.mrb[0].mxu0 %v145
    %v213 = vpop.f32.mrb[0].mxu0
    %v214 = vadd.f32 0.0, %v213
    %v215 = vpop.f32.mrb[0].mxu0
    %216 = vdwg.mxu0
    %v217 = vld [vmem:[#allocation7] sm:$0xff]
    %v218 = vld [vmem:[#allocation7 + $0x8] sm:$0xff]
    %v219 = vld [vmem:[#allocation7 + $0x10] sm:$0xff]
    %v220 = vld [vmem:[#allocation7 + $0x18] sm:$0xff]
    %221 = vmatprep.subr.mxu0 0.0
    %222 = vmatpush1.msra.mxu0 %v217
    %223 = vmatprep.subr.mxu0 0.0
    %224 = vmatpush1.msra.mxu0 %v218
    %225 = vmatprep.subr.mxu0 0.0
    %226 = vmatpush1.msra.mxu0 %v219
    %227 = vmatprep.subr.mxu0 0.0
    %228 = vmatpush1.msra.mxu0 %v220
    %229 = vmatprep.subr.mxu0 0.0
    %230 = vmatpush1.msra.mxu0 0.0
    %231 = vmatprep.subr.mxu0 0.0
    %232 = vmatpush1.msra.mxu0 0.0
    %233 = vmatprep.subr.mxu0 0.0
    %234 = vmatpush1.msra.mxu0 0.0
    %235 = vmatprep.subr.mxu0 0.0
    %236 = vmatpush1.msra.mxu0 0.0
    %237 = vmatprep.subr.mxu0 0.0
    %238 = vmatpush1.msra.mxu0 0.0
    %239 = vmatprep.subr.mxu0 0.0
    %240 = vmatpush1.msra.mxu0 0.0
    %241 = vmatprep.subr.mxu0 0.0
    %242 = vmatpush1.msra.mxu0 0.0
    %243 = vmatprep.subr.mxu0 0.0
    %244 = vmatpush1.msra.mxu0 0.0
    %245 = vmatprep.subr.mxu0 0.0
    %246 = vmatpush1.msra.mxu0 0.0
    %247 = vmatprep.subr.mxu0 0.0
    %248 = vmatpush1.msra.mxu0 0.0
    %249 = vmatprep.subr.mxu0 0.0
    %250 = vmatpush1.msra.mxu0 0.0
    %251 = vmatprep.subr.mxu0 0.0
    %252 = vmatpush1.msra.mxu0 0.0
    %253 = vmatprep.subr.mxu0 0.0
    %254 = vmatpush1.msra.mxu0 0.0
    %255 = vmatprep.subr.mxu0 0.0
    %256 = vmatpush1.msra.mxu0 0.0
    %257 = vmatprep.subr.mxu0 0.0
    %258 = vmatpush1.msra.mxu0 0.0
    %259 = vmatprep.subr.mxu0 0.0
    %260 = vmatpush1.msra.mxu0 0.0
    %261 = vmatprep.subr.mxu0 0.0
    %262 = vmatpush1.msra.mxu0 0.0
    %263 = vmatprep.subr.mxu0 0.0
    %264 = vmatpush1.msra.mxu0 0.0
    %265 = vmatprep.subr.mxu0 0.0
    %266 = vmatpush1.msra.mxu0 0.0
    %267 = vmatprep.subr.mxu0 0.0
    %268 = vmatpush1.msra.mxu0 0.0
    %269 = vmatprep.subr.mxu0 0.0
    %270 = vmatpush1.msra.mxu0 0.0
    %271 = vmatprep.subr.mxu0 0.0
    %272 = vmatpush1.msra.mxu0 0.0
    %273 = vmatprep.subr.mxu0 0.0
    %274 = vmatpush1.msra.mxu0 0.0
    %275 = vmatprep.subr.mxu0 0.0
    %276 = vmatpush1.msra.mxu0 0.0
    %277 = vmatprep.subr.mxu0 0.0
    %278 = vmatpush1.msra.mxu0 0.0
    %279 = vmatprep.subr.mxu0 0.0
    %280 = vmatpush1.msra.mxu0 0.0
    %281 = vmatprep.subr.mxu0 0.0
    %282 = vmatpush1.msra.mxu0 0.0
    %283 = vmatprep.subr.mxu0 0.0
    %284 = vmatpush1.msra.mxu0 0.0
    %285 = vmatprep.mubr.f32.mxu0 0.0
    %286 = vmatmul.mubr.f32.gmra.mrb[0].mxu0 %v145
    %v287 = vpop.f32.mrb[0].mxu0
    %v288 = vadd.f32 0.0, %v287
    %v289 = vpop.f32.mrb[0].mxu0
    %290 = vdwg.mxu0
    %v291 = vld [vmem:[#allocation8] sm:$0xff]
    %v292 = vld [vmem:[#allocation8 + $0x8] sm:$0xff]
    %v293 = vld [vmem:[#allocation8 + $0x10] sm:$0xff]
    %v294 = vld [vmem:[#allocation8 + $0x18] sm:$0xff]
    %295 = vmatprep.subr.mxu0 0.0
    %296 = vmatpush1.msra.mxu0 %v291
    %297 = vmatprep.subr.mxu0 0.0
    %298 = vmatpush1.msra.mxu0 %v292
    %299 = vmatprep.subr.mxu0 0.0
    %300 = vmatpush1.msra.mxu0 %v293
    %301 = vmatprep.subr.mxu0 0.0
    %302 = vmatpush1.msra.mxu0 %v294
    %303 = vmatprep.subr.mxu0 0.0
    %304 = vmatpush1.msra.mxu0 0.0
    %305 = vmatprep.subr.mxu0 0.0
    %306 = vmatpush1.msra.mxu0 0.0
    %307 = vmatprep.subr.mxu0 0.0
    %308 = vmatpush1.msra.mxu0 0.0
    %309 = vmatprep.subr.mxu0 0.0
    %310 = vmatpush1.msra.mxu0 0.0
    %311 = vmatprep.subr.mxu0 0.0
    %312 = vmatpush1.msra.mxu0 0.0
    %313 = vmatprep.subr.mxu0 0.0
    %314 = vmatpush1.msra.mxu0 0.0
    %315 = vmatprep.subr.mxu0 0.0
    %316 = vmatpush1.msra.mxu0 0.0
    %317 = vmatprep.subr.mxu0 0.0
    %318 = vmatpush1.msra.mxu0 0.0
    %319 = vmatprep.subr.mxu0 0.0
    %320 = vmatpush1.msra.mxu0 0.0
    %321 = vmatprep.subr.mxu0 0.0
    %322 = vmatpush1.msra.mxu0 0.0
    %323 = vmatprep.subr.mxu0 0.0
    %324 = vmatpush1.msra.mxu0 0.0
    %325 = vmatprep.subr.mxu0 0.0
    %326 = vmatpush1.msra.mxu0 0.0
    %327 = vmatprep.subr.mxu0 0.0
    %328 = vmatpush1.msra.mxu0 0.0
    %329 = vmatprep.subr.mxu0 0.0
    %330 = vmatpush1.msra.mxu0 0.0
    %331 = vmatprep.subr.mxu0 0.0
    %332 = vmatpush1.msra.mxu0 0.0
    %333 = vmatprep.subr.mxu0 0.0
    %334 = vmatpush1.msra.mxu0 0.0
    %335 = vmatprep.subr.mxu0 0.0
    %336 = vmatpush1.msra.mxu0 0.0
    %337 = vmatprep.subr.mxu0 0.0
    %338 = vmatpush1.msra.mxu0 0.0
    %339 = vmatprep.subr.mxu0 0.0
    %340 = vmatpush1.msra.mxu0 0.0
    %341 = vmatprep.subr.mxu0 0.0
    %342 = vmatpush1.msra.mxu0 0.0
    %343 = vmatprep.subr.mxu0 0.0
    %344 = vmatpush1.msra.mxu0 0.0
    %345 = vmatprep.subr.mxu0 0.0
    %346 = vmatpush1.msra.mxu0 0.0
    %347 = vmatprep.subr.mxu0 0.0
    %348 = vmatpush1.msra.mxu0 0.0
    %349 = vmatprep.subr.mxu0 0.0
    %350 = vmatpush1.msra.mxu0 0.0
    %351 = vmatprep.subr.mxu0 0.0
    %352 = vmatpush1.msra.mxu0 0.0
    %353 = vmatprep.subr.mxu0 0.0
    %354 = vmatpush1.msra.mxu0 0.0
    %355 = vmatprep.subr.mxu0 0.0
    %356 = vmatpush1.msra.mxu0 0.0
    %357 = vmatprep.subr.mxu0 0.0
    %358 = vmatpush1.msra.mxu0 0.0
    %359 = vmatprep.mubr.f32.mxu0 0.0
    %360 = vmatmul.mubr.f32.gmra.mrb[0].mxu0 %v145
    %v361 = vpop.f32.mrb[0].mxu0
    %v362 = vadd.f32 0.0, %v361
    %v363 = vpop.f32.mrb[0].mxu0
    %364 = vdwg.mxu0
    %v365 = vld [vmem:[%s4] sm:$0x1]
    %v367 = vlaneseq
    %v368 = vshrl.u32 %v367, 7
    %v369 = vsub.s32 0, %v368
    %v370 = vrot.slane %v365, %v369
    %v372 = vmul.f32 %v214, %v370
    %v374 = vsel %vm143, %v372, 0
    %v377 = vsel %vm143, %v288, 0
    %379 = vmatprep.subr.mxu0 0.0
    %380 = vmatpush1.xpose.msra.mxu0 %v377
    %381 = vmatprep.subr.mxu0 0.0
    %382 = vmatpush1.xpose.msra.mxu0 0.0
    %383 = vmatprep.subr.mxu0 0.0
    %384 = vmatpush1.xpose.msra.mxu0 0.0
    %385 = vmatprep.subr.mxu0 0.0
    %386 = vmatpush1.xpose.msra.mxu0 0.0
    %387 = vmatprep.subr.mxu0 0.0
    %388 = vmatpush1.xpose.msra.mxu0 0.0
    %389 = vmatprep.subr.mxu0 0.0
    %390 = vmatpush1.xpose.msra.mxu0 0.0
    %391 = vmatprep.subr.mxu0 0.0
    %392 = vmatpush1.xpose.msra.mxu0 0.0
    %393 = vmatprep.subr.mxu0 0.0
    %394 = vmatpush1.xpose.msra.mxu0 0.0
    %395 = vmatprep.subr.mxu0 0.0
    %396 = vmatpush1.xpose.msra.mxu0 0.0
    %397 = vmatprep.subr.mxu0 0.0
    %398 = vmatpush1.xpose.msra.mxu0 0.0
    %399 = vmatprep.subr.mxu0 0.0
    %400 = vmatpush1.xpose.msra.mxu0 0.0
    %401 = vmatprep.subr.mxu0 0.0
    %402 = vmatpush1.xpose.msra.mxu0 0.0
    %403 = vmatprep.subr.mxu0 0.0
    %404 = vmatpush1.xpose.msra.mxu0 0.0
    %405 = vmatprep.subr.mxu0 0.0
    %406 = vmatpush1.xpose.msra.mxu0 0.0
    %407 = vmatprep.subr.mxu0 0.0
    %408 = vmatpush1.xpose.msra.mxu0 0.0
    %409 = vmatprep.subr.mxu0 0.0
    %410 = vmatpush1.xpose.msra.mxu0 0.0
    %411 = vmatprep.subr.mxu0 0.0
    %412 = vmatpush1.xpose.msra.mxu0 0.0
    %413 = vmatprep.subr.mxu0 0.0
    %414 = vmatpush1.xpose.msra.mxu0 0.0
    %415 = vmatprep.subr.mxu0 0.0
    %416 = vmatpush1.xpose.msra.mxu0 0.0
    %417 = vmatprep.subr.mxu0 0.0
    %418 = vmatpush1.xpose.msra.mxu0 0.0
    %419 = vmatprep.subr.mxu0 0.0
    %420 = vmatpush1.xpose.msra.mxu0 0.0
    %421 = vmatprep.subr.mxu0 0.0
    %422 = vmatpush1.xpose.msra.mxu0 0.0
    %423 = vmatprep.subr.mxu0 0.0
    %424 = vmatpush1.xpose.msra.mxu0 0.0
    %425 = vmatprep.subr.mxu0 0.0
    %426 = vmatpush1.xpose.msra.mxu0 0.0
    %427 = vmatprep.subr.mxu0 0.0
    %428 = vmatpush1.xpose.msra.mxu0 0.0
    %429 = vmatprep.subr.mxu0 0.0
    %430 = vmatpush1.xpose.msra.mxu0 0.0
    %431 = vmatprep.subr.mxu0 0.0
    %432 = vmatpush1.xpose.msra.mxu0 0.0
    %433 = vmatprep.subr.mxu0 0.0
    %434 = vmatpush1.xpose.msra.mxu0 0.0
    %435 = vmatprep.subr.mxu0 0.0
    %436 = vmatpush1.xpose.msra.mxu0 0.0
    %437 = vmatprep.subr.mxu0 0.0
    %438 = vmatpush1.xpose.msra.mxu0 0.0
    %439 = vmatprep.subr.mxu0 0.0
    %440 = vmatpush1.xpose.msra.mxu0 0.0
    %441 = vmatprep.subr.mxu0 0.0
    %442 = vmatpush1.xpose.msra.mxu0 0.0
    %443 = vmatprep.mubr.f32.mxu0 0.0
    %444 = vmatmul.mubr.f32.gmra.mrb[0].mxu0 %v374
    %v445 = vpop.f32.mrb[0].mxu0
    %v446 = vadd.f32 0.0, %v445
    %v447 = vpop.f32.mrb[0].mxu0
    %448 = vdwg.mxu0
    %v449 = vmul.f32 %v446, 0.35355338
    %vm450 = vcmask 64512
    %v451 = vsel %vm450, %v449, -inf
    %452 = vmax.xlane.f32.xlu0 %v451
    %v453 = vpop.xlane.xlu0 %452
    %v454 = vsub.f32 %v449, %v453
    %v455 = vmul.f32 %v454, 1.442695
    %v456 = vpow.pop %v455
    %v457 = vsel %vm450, %v456, 0.0
    %458 = vadd.xlane.f32.xlu0 %v457
    %v459 = vpop.xlane.xlu0 %458
    %v460 = vrcp.pop %v459
    %v461 = vmul.f32 %v456, %v460
    %v462 = vmul.f32 %v362, %v370
    %s463 = scalar_lea.vmem %s4, 1
    %v464 = vld [vmem:[%s463] sm:$0x1]
    %v466 = vlaneseq
    %v467 = vshrl.u32 %v466, 7
    %v468 = vsub.s32 0, %v467
    %v469 = vrot.slane %v464, %v468
    %v471 = vmul.f32 %v214, %v469
    %v473 = vsel %vm143, %v471, 0
    %475 = vmatprep.subr.mxu0 0.0
    %476 = vmatpush1.xpose.msra.mxu0 %v377
    %477 = vmatprep.subr.mxu0 0.0
    %478 = vmatpush1.xpose.msra.mxu0 0.0
    %479 = vmatprep.subr.mxu0 0.0
    %480 = vmatpush1.xpose.msra.mxu0 0.0
    %481 = vmatprep.subr.mxu0 0.0
    %482 = vmatpush1.xpose.msra.mxu0 0.0
    %483 = vmatprep.subr.mxu0 0.0
    %484 = vmatpush1.xpose.msra.mxu0 0.0
    %485 = vmatprep.subr.mxu0 0.0
    %486 = vmatpush1.xpose.msra.mxu0 0.0
    %487 = vmatprep.subr.mxu0 0.0
    %488 = vmatpush1.xpose.msra.mxu0 0.0
    %489 = vmatprep.subr.mxu0 0.0
    %490 = vmatpush1.xpose.msra.mxu0 0.0
    %491 = vmatprep.subr.mxu0 0.0
    %492 = vmatpush1.xpose.msra.mxu0 0.0
    %493 = vmatprep.subr.mxu0 0.0
    %494 = vmatpush1.xpose.msra.mxu0 0.0
    %495 = vmatprep.subr.mxu0 0.0
    %496 = vmatpush1.xpose.msra.mxu0 0.0
    %497 = vmatprep.subr.mxu0 0.0
    %498 = vmatpush1.xpose.msra.mxu0 0.0
    %499 = vmatprep.subr.mxu0 0.0
    %500 = vmatpush1.xpose.msra.mxu0 0.0
    %501 = vmatprep.subr.mxu0 0.0
    %502 = vmatpush1.xpose.msra.mxu0 0.0
    %503 = vmatprep.subr.mxu0 0.0
    %504 = vmatpush1.xpose.msra.mxu0 0.0
    %505 = vmatprep.subr.mxu0 0.0
    %506 = vmatpush1.xpose.msra.mxu0 0.0
    %507 = vmatprep.subr.mxu0 0.0
    %508 = vmatpush1.xpose.msra.mxu0 0.0
    %509 = vmatprep.subr.mxu0 0.0
    %510 = vmatpush1.xpose.msra.mxu0 0.0
    %511 = vmatprep.subr.mxu0 0.0
    %512 = vmatpush1.xpose.msra.mxu0 0.0
    %513 = vmatprep.subr.mxu0 0.0
    %514 = vmatpush1.xpose.msra.mxu0 0.0
    %515 = vmatprep.subr.mxu0 0.0
    %516 = vmatpush1.xpose.msra.mxu0 0.0
    %517 = vmatprep.subr.mxu0 0.0
    %518 = vmatpush1.xpose.msra.mxu0 0.0
    %519 = vmatprep.subr.mxu0 0.0
    %520 = vmatpush1.xpose.msra.mxu0 0.0
    %521 = vmatprep.subr.mxu0 0.0
    %522 = vmatpush1.xpose.msra.mxu0 0.0
    %523 = vmatprep.subr.mxu0 0.0
    %524 = vmatpush1.xpose.msra.mxu0 0.0
    %525 = vmatprep.subr.mxu0 0.0
    %526 = vmatpush1.xpose.msra.mxu0 0.0
    %527 = vmatprep.subr.mxu0 0.0
    %528 = vmatpush1.xpose.msra.mxu0 0.0
    %529 = vmatprep.subr.mxu0 0.0
    %530 = vmatpush1.xpose.msra.mxu0 0.0
    %531 = vmatprep.subr.mxu0 0.0
    %532 = vmatpush1.xpose.msra.mxu0 0.0
    %533 = vmatprep.subr.mxu0 0.0
    %534 = vmatpush1.xpose.msra.mxu0 0.0
    %535 = vmatprep.subr.mxu0 0.0
    %536 = vmatpush1.xpose.msra.mxu0 0.0
    %537 = vmatprep.subr.mxu0 0.0
    %538 = vmatpush1.xpose.msra.mxu0 0.0
    %539 = vmatprep.mubr.f32.mxu0 0.0
    %540 = vmatmul.mubr.f32.gmra.mrb[0].mxu0 %v473
    %v541 = vpop.f32.mrb[0].mxu0
    %v542 = vadd.f32 0.0, %v541
    %v543 = vpop.f32.mrb[0].mxu0
    %544 = vdwg.mxu0
    %v545 = vmul.f32 %v542, 0.35355338
    %v546 = vsel %vm450, %v545, -inf
    %547 = vmax.xlane.f32.xlu0 %v546
    %v548 = vpop.xlane.xlu0 %547
    %v549 = vsub.f32 %v545, %v548
    %v550 = vmul.f32 %v549, 1.442695
    %v551 = vpow.pop %v550
    %v552 = vsel %vm450, %v551, 0.0
    %553 = vadd.xlane.f32.xlu0 %v552
    %v554 = vpop.xlane.xlu0 %553
    %v555 = vrcp.pop %v554
    %v556 = vmul.f32 %v551, %v555
    %v557 = vmul.f32 %v362, %v469
    %v559 = vsel %vm450, %v556, 0
    %561 = vmatprep.subr.mxu0 0.0
    %562 = vmatpush1.msra.mxu0 %v557
    %563 = vmatprep.subr.mxu0 0.0
    %564 = vmatpush1.msra.mxu0 0.0
    %565 = vmatprep.subr.mxu0 0.0
    %566 = vmatpush1.msra.mxu0 0.0
    %567 = vmatprep.subr.mxu0 0.0
    %568 = vmatpush1.msra.mxu0 0.0
    %569 = vmatprep.subr.mxu0 0.0
    %570 = vmatpush1.msra.mxu0 0.0
    %571 = vmatprep.subr.mxu0 0.0
    %572 = vmatpush1.msra.mxu0 0.0
    %573 = vmatprep.subr.mxu0 0.0
    %574 = vmatpush1.msra.mxu0 0.0
    %575 = vmatprep.subr.mxu0 0.0
    %576 = vmatpush1.msra.mxu0 0.0
    %577 = vmatprep.subr.mxu0 0.0
    %578 = vmatpush1.msra.mxu0 0.0
    %579 = vmatprep.subr.mxu0 0.0
    %580 = vmatpush1.msra.mxu0 0.0
    %581 = vmatprep.subr.mxu0 0.0
    %582 = vmatpush1.msra.mxu0 0.0
    %583 = vmatprep.subr.mxu0 0.0
    %584 = vmatpush1.msra.mxu0 0.0
    %585 = vmatprep.subr.mxu0 0.0
    %586 = vmatpush1.msra.mxu0 0.0
    %587 = vmatprep.subr.mxu0 0.0
    %588 = vmatpush1.msra.mxu0 0.0
    %589 = vmatprep.subr.mxu0 0.0
    %590 = vmatpush1.msra.mxu0 0.0
    %591 = vmatprep.subr.mxu0 0.0
    %592 = vmatpush1.msra.mxu0 0.0
    %593 = vmatprep.subr.mxu0 0.0
    %594 = vmatpush1.msra.mxu0 0.0
    %595 = vmatprep.subr.mxu0 0.0
    %596 = vmatpush1.msra.mxu0 0.0
    %597 = vmatprep.subr.mxu0 0.0
    %598 = vmatpush1.msra.mxu0 0.0
    %599 = vmatprep.subr.mxu0 0.0
    %600 = vmatpush1.msra.mxu0 0.0
    %601 = vmatprep.subr.mxu0 0.0
    %602 = vmatpush1.msra.mxu0 0.0
    %603 = vmatprep.subr.mxu0 0.0
    %604 = vmatpush1.msra.mxu0 0.0
    %605 = vmatprep.subr.mxu0 0.0
    %606 = vmatpush1.msra.mxu0 0.0
    %607 = vmatprep.subr.mxu0 0.0
    %608 = vmatpush1.msra.mxu0 0.0
    %609 = vmatprep.subr.mxu0 0.0
    %610 = vmatpush1.msra.mxu0 0.0
    %611 = vmatprep.subr.mxu0 0.0
    %612 = vmatpush1.msra.mxu0 0.0
    %613 = vmatprep.subr.mxu0 0.0
    %614 = vmatpush1.msra.mxu0 0.0
    %615 = vmatprep.subr.mxu0 0.0
    %616 = vmatpush1.msra.mxu0 0.0
    %617 = vmatprep.subr.mxu0 0.0
    %618 = vmatpush1.msra.mxu0 0.0
    %619 = vmatprep.subr.mxu0 0.0
    %620 = vmatpush1.msra.mxu0 0.0
    %621 = vmatprep.subr.mxu0 0.0
    %622 = vmatpush1.msra.mxu0 0.0
    %623 = vmatprep.subr.mxu0 0.0
    %624 = vmatpush1.msra.mxu0 0.0
    %625 = vmatprep.mubr.f32.mxu0 0.0
    %626 = vmatmul.mubr.f32.gmra.mrb[0].mxu0 %v559
    %v627 = vpop.f32.mrb[0].mxu0
    %v628 = vadd.f32 0.0, %v627
    %v629 = vpop.f32.mrb[0].mxu0
    %630 = vdwg.mxu0
    %v632 = vsel %vm450, %v461, 0
    %634 = vmatprep.subr.mxu0 0.0
    %635 = vmatpush1.msra.mxu0 %v462
    %636 = vmatprep.subr.mxu0 0.0
    %637 = vmatpush1.msra.mxu0 0.0
    %638 = vmatprep.subr.mxu0 0.0
    %639 = vmatpush1.msra.mxu0 0.0
    %640 = vmatprep.subr.mxu0 0.0
    %641 = vmatpush1.msra.mxu0 0.0
    %642 = vmatprep.subr.mxu0 0.0
    %643 = vmatpush1.msra.mxu0 0.0
    %644 = vmatprep.subr.mxu0 0.0
    %645 = vmatpush1.msra.mxu0 0.0
    %646 = vmatprep.subr.mxu0 0.0
    %647 = vmatpush1.msra.mxu0 0.0
    %648 = vmatprep.subr.mxu0 0.0
    %649 = vmatpush1.msra.mxu0 0.0
    %650 = vmatprep.subr.mxu0 0.0
    %651 = vmatpush1.msra.mxu0 0.0
    %652 = vmatprep.subr.mxu0 0.0
    %653 = vmatpush1.msra.mxu0 0.0
    %654 = vmatprep.subr.mxu0 0.0
    %655 = vmatpush1.msra.mxu0 0.0
    %656 = vmatprep.subr.mxu0 0.0
    %657 = vmatpush1.msra.mxu0 0.0
    %658 = vmatprep.subr.mxu0 0.0
    %659 = vmatpush1.msra.mxu0 0.0
    %660 = vmatprep.subr.mxu0 0.0
    %661 = vmatpush1.msra.mxu0 0.0
    %662 = vmatprep.subr.mxu0 0.0
    %663 = vmatpush1.msra.mxu0 0.0
    %664 = vmatprep.subr.mxu0 0.0
    %665 = vmatpush1.msra.mxu0 0.0
    %666 = vmatprep.subr.mxu0 0.0
    %667 = vmatpush1.msra.mxu0 0.0
    %668 = vmatprep.subr.mxu0 0.0
    %669 = vmatpush1.msra.mxu0 0.0
    %670 = vmatprep.subr.mxu0 0.0
    %671 = vmatpush1.msra.mxu0 0.0
    %672 = vmatprep.subr.mxu0 0.0
    %673 = vmatpush1.msra.mxu0 0.0
    %674 = vmatprep.subr.mxu0 0.0
    %675 = vmatpush1.msra.mxu0 0.0
    %676 = vmatprep.subr.mxu0 0.0
    %677 = vmatpush1.msra.mxu0 0.0
    %678 = vmatprep.subr.mxu0 0.0
    %679 = vmatpush1.msra.mxu0 0.0
    %680 = vmatprep.subr.mxu0 0.0
    %681 = vmatpush1.msra.mxu0 0.0
    %682 = vmatprep.subr.mxu0 0.0
    %683 = vmatpush1.msra.mxu0 0.0
    %684 = vmatprep.subr.mxu0 0.0
    %685 = vmatpush1.msra.mxu0 0.0
    %686 = vmatprep.subr.mxu0 0.0
    %687 = vmatpush1.msra.mxu0 0.0
    %688 = vmatprep.subr.mxu0 0.0
    %689 = vmatpush1.msra.mxu0 0.0
    %690 = vmatprep.subr.mxu0 0.0
    %691 = vmatpush1.msra.mxu0 0.0
    %692 = vmatprep.subr.mxu0 0.0
    %693 = vmatpush1.msra.mxu0 0.0
    %694 = vmatprep.subr.mxu0 0.0
    %695 = vmatpush1.msra.mxu0 0.0
    %696 = vmatprep.subr.mxu0 0.0
    %697 = vmatpush1.msra.mxu0 0.0
    %698 = vmatprep.mubr.f32.mxu0 0.0
    %699 = vmatmul.mubr.f32.gmra.mrb[0].mxu0 %v632
    %v700 = vpop.f32.mrb[0].mxu0
    %v701 = vadd.f32 %v628, %v700
    %v702 = vpop.f32.mrb[0].mxu0
    %703 = vdwg.mxu0
    %s704 = scalar_lea.vmem %s4, 2
    %v705 = vld [vmem:[%s704] sm:$0x1]
    %v707 = vlaneseq
    %v708 = vshrl.u32 %v707, 7
    %v709 = vsub.s32 0, %v708
    %v710 = vrot.slane %v705, %v709
    %v712 = vmul.f32 %v214, %v710
    %v714 = vsel %vm143, %v712, 0
    %716 = vmatprep.subr.mxu0 0.0
    %717 = vmatpush1.xpose.msra.mxu0 %v377
    %718 = vmatprep.subr.mxu0 0.0
    %719 = vmatpush1.xpose.msra.mxu0 0.0
    %720 = vmatprep.subr.mxu0 0.0
    %721 = vmatpush1.xpose.msra.mxu0 0.0
    %722 = vmatprep.subr.mxu0 0.0
    %723 = vmatpush1.xpose.msra.mxu0 0.0
    %724 = vmatprep.subr.mxu0 0.0
    %725 = vmatpush1.xpose.msra.mxu0 0.0
    %726 = vmatprep.subr.mxu0 0.0
    %727 = vmatpush1.xpose.msra.mxu0 0.0
    %728 = vmatprep.subr.mxu0 0.0
    %729 = vmatpush1.xpose.msra.mxu0 0.0
    %730 = vmatprep.subr.mxu0 0.0
    %731 = vmatpush1.xpose.msra.mxu0 0.0
    %732 = vmatprep.subr.mxu0 0.0
    %733 = vmatpush1.xpose.msra.mxu0 0.0
    %734 = vmatprep.subr.mxu0 0.0
    %735 = vmatpush1.xpose.msra.mxu0 0.0
    %736 = vmatprep.subr.mxu0 0.0
    %737 = vmatpush1.xpose.msra.mxu0 0.0
    %738 = vmatprep.subr.mxu0 0.0
    %739 = vmatpush1.xpose.msra.mxu0 0.0
    %740 = vmatprep.subr.mxu0 0.0
    %741 = vmatpush1.xpose.msra.mxu0 0.0
    %742 = vmatprep.subr.mxu0 0.0
    %743 = vmatpush1.xpose.msra.mxu0 0.0
    %744 = vmatprep.subr.mxu0 0.0
    %745 = vmatpush1.xpose.msra.mxu0 0.0
    %746 = vmatprep.subr.mxu0 0.0
    %747 = vmatpush1.xpose.msra.mxu0 0.0
    %748 = vmatprep.subr.mxu0 0.0
    %749 = vmatpush1.xpose.msra.mxu0 0.0
    %750 = vmatprep.subr.mxu0 0.0
    %751 = vmatpush1.xpose.msra.mxu0 0.0
    %752 = vmatprep.subr.mxu0 0.0
    %753 = vmatpush1.xpose.msra.mxu0 0.0
    %754 = vmatprep.subr.mxu0 0.0
    %755 = vmatpush1.xpose.msra.mxu0 0.0
    %756 = vmatprep.subr.mxu0 0.0
    %757 = vmatpush1.xpose.msra.mxu0 0.0
    %758 = vmatprep.subr.mxu0 0.0
    %759 = vmatpush1.xpose.msra.mxu0 0.0
    %760 = vmatprep.subr.mxu0 0.0
    %761 = vmatpush1.xpose.msra.mxu0 0.0
    %762 = vmatprep.subr.mxu0 0.0
    %763 = vmatpush1.xpose.msra.mxu0 0.0
    %764 = vmatprep.subr.mxu0 0.0
    %765 = vmatpush1.xpose.msra.mxu0 0.0
    %766 = vmatprep.subr.mxu0 0.0
    %767 = vmatpush1.xpose.msra.mxu0 0.0
    %768 = vmatprep.subr.mxu0 0.0
    %769 = vmatpush1.xpose.msra.mxu0 0.0
    %770 = vmatprep.subr.mxu0 0.0
    %771 = vmatpush1.xpose.msra.mxu0 0.0
    %772 = vmatprep.subr.mxu0 0.0
    %773 = vmatpush1.xpose.msra.mxu0 0.0
    %774 = vmatprep.subr.mxu0 0.0
    %775 = vmatpush1.xpose.msra.mxu0 0.0
    %776 = vmatprep.subr.mxu0 0.0
    %777 = vmatpush1.xpose.msra.mxu0 0.0
    %778 = vmatprep.subr.mxu0 0.0
    %779 = vmatpush1.xpose.msra.mxu0 0.0
    %780 = vmatprep.mubr.f32.mxu0 0.0
    %781 = vmatmul.mubr.f32.gmra.mrb[0].mxu0 %v714
    %v782 = vpop.f32.mrb[0].mxu0
    %v783 = vadd.f32 0.0, %v782
    %v784 = vpop.f32.mrb[0].mxu0
    %785 = vdwg.mxu0
    %v786 = vmul.f32 %v783, 0.35355338
    %v787 = vsel %vm450, %v786, -inf
    %788 = vmax.xlane.f32.xlu0 %v787
    %v789 = vpop.xlane.xlu0 %788
    %v790 = vsub.f32 %v786, %v789
    %v791 = vmul.f32 %v790, 1.442695
    %v792 = vpow.pop %v791
    %v793 = vsel %vm450, %v792, 0.0
    %794 = vadd.xlane.f32.xlu0 %v793
    %v795 = vpop.xlane.xlu0 %794
    %v796 = vrcp.pop %v795
    %v797 = vmul.f32 %v792, %v796
    %v798 = vmul.f32 %v362, %v710
    %v800 = vsel %vm450, %v797, 0
    %802 = vmatprep.subr.mxu0 0.0
    %803 = vmatpush1.msra.mxu0 %v798
    %804 = vmatprep.subr.mxu0 0.0
    %805 = vmatpush1.msra.mxu0 0.0
    %806 = vmatprep.subr.mxu0 0.0
    %807 = vmatpush1.msra.mxu0 0.0
    %808 = vmatprep.subr.mxu0 0.0
    %809 = vmatpush1.msra.mxu0 0.0
    %810 = vmatprep.subr.mxu0 0.0
    %811 = vmatpush1.msra.mxu0 0.0
    %812 = vmatprep.subr.mxu0 0.0
    %813 = vmatpush1.msra.mxu0 0.0
    %814 = vmatprep.subr.mxu0 0.0
    %815 = vmatpush1.msra.mxu0 0.0
    %816 = vmatprep.subr.mxu0 0.0
    %817 = vmatpush1.msra.mxu0 0.0
    %818 = vmatprep.subr.mxu0 0.0
    %819 = vmatpush1.msra.mxu0 0.0
    %820 = vmatprep.subr.mxu0 0.0
    %821 = vmatpush1.msra.mxu0 0.0
    %822 = vmatprep.subr.mxu0 0.0
    %823 = vmatpush1.msra.mxu0 0.0
    %824 = vmatprep.subr.mxu0 0.0
    %825 = vmatpush1.msra.mxu0 0.0
    %826 = vmatprep.subr.mxu0 0.0
    %827 = vmatpush1.msra.mxu0 0.0
    %828 = vmatprep.subr.mxu0 0.0
    %829 = vmatpush1.msra.mxu0 0.0
    %830 = vmatprep.subr.mxu0 0.0
    %831 = vmatpush1.msra.mxu0 0.0
    %832 = vmatprep.subr.mxu0 0.0
    %833 = vmatpush1.msra.mxu0 0.0
    %834 = vmatprep.subr.mxu0 0.0
    %835 = vmatpush1.msra.mxu0 0.0
    %836 = vmatprep.subr.mxu0 0.0
    %837 = vmatpush1.msra.mxu0 0.0
    %838 = vmatprep.subr.mxu0 0.0
    %839 = vmatpush1.msra.mxu0 0.0
    %840 = vmatprep.subr.mxu0 0.0
    %841 = vmatpush1.msra.mxu0 0.0
    %842 = vmatprep.subr.mxu0 0.0
    %843 = vmatpush1.msra.mxu0 0.0
    %844 = vmatprep.subr.mxu0 0.0
    %845 = vmatpush1.msra.mxu0 0.0
    %846 = vmatprep.subr.mxu0 0.0
    %847 = vmatpush1.msra.mxu0 0.0
    %848 = vmatprep.subr.mxu0 0.0
    %849 = vmatpush1.msra.mxu0 0.0
    %850 = vmatprep.subr.mxu0 0.0
    %851 = vmatpush1.msra.mxu0 0.0
    %852 = vmatprep.subr.mxu0 0.0
    %853 = vmatpush1.msra.mxu0 0.0
    %854 = vmatprep.subr.mxu0 0.0
    %855 = vmatpush1.msra.mxu0 0.0
    %856 = vmatprep.subr.mxu0 0.0
    %857 = vmatpush1.msra.mxu0 0.0
    %858 = vmatprep.subr.mxu0 0.0
    %859 = vmatpush1.msra.mxu0 0.0
    %860 = vmatprep.subr.mxu0 0.0
    %861 = vmatpush1.msra.mxu0 0.0
    %862 = vmatprep.subr.mxu0 0.0
    %863 = vmatpush1.msra.mxu0 0.0
    %864 = vmatprep.subr.mxu0 0.0
    %865 = vmatpush1.msra.mxu0 0.0
    %866 = vmatprep.mubr.f32.mxu0 0.0
    %867 = vmatmul.mubr.f32.gmra.mrb[0].mxu0 %v800
    %v868 = vpop.f32.mrb[0].mxu0
    %v869 = vadd.f32 0.0, %v868
    %v870 = vpop.f32.mrb[0].mxu0
    %871 = vdwg.mxu0
    %v872 = vadd.f32 %v701, %v869
    %s873 = scalar_lea.vmem %s4, 3
    %v874 = vld [vmem:[%s873] sm:$0x1]
    %v876 = vlaneseq
    %v877 = vshrl.u32 %v876, 7
    %v878 = vsub.s32 0, %v877
    %v879 = vrot.slane %v874, %v878
    %v881 = vmul.f32 %v214, %v879
    %v883 = vsel %vm143, %v881, 0
    %885 = vmatprep.subr.mxu0 0.0
    %886 = vmatpush1.xpose.msra.mxu0 %v377
    %887 = vmatprep.subr.mxu0 0.0
    %888 = vmatpush1.xpose.msra.mxu0 0.0
    %889 = vmatprep.subr.mxu0 0.0
    %890 = vmatpush1.xpose.msra.mxu0 0.0
    %891 = vmatprep.subr.mxu0 0.0
    %892 = vmatpush1.xpose.msra.mxu0 0.0
    %893 = vmatprep.subr.mxu0 0.0
    %894 = vmatpush1.xpose.msra.mxu0 0.0
    %895 = vmatprep.subr.mxu0 0.0
    %896 = vmatpush1.xpose.msra.mxu0 0.0
    %897 = vmatprep.subr.mxu0 0.0
    %898 = vmatpush1.xpose.msra.mxu0 0.0
    %899 = vmatprep.subr.mxu0 0.0
    %900 = vmatpush1.xpose.msra.mxu0 0.0
    %901 = vmatprep.subr.mxu0 0.0
    %902 = vmatpush1.xpose.msra.mxu0 0.0
    %903 = vmatprep.subr.mxu0 0.0
    %904 = vmatpush1.xpose.msra.mxu0 0.0
    %905 = vmatprep.subr.mxu0 0.0
    %906 = vmatpush1.xpose.msra.mxu0 0.0
    %907 = vmatprep.subr.mxu0 0.0
    %908 = vmatpush1.xpose.msra.mxu0 0.0
    %909 = vmatprep.subr.mxu0 0.0
    %910 = vmatpush1.xpose.msra.mxu0 0.0
    %911 = vmatprep.subr.mxu0 0.0
    %912 = vmatpush1.xpose.msra.mxu0 0.0
    %913 = vmatprep.subr.mxu0 0.0
    %914 = vmatpush1.xpose.msra.mxu0 0.0
    %915 = vmatprep.subr.mxu0 0.0
    %916 = vmatpush1.xpose.msra.mxu0 0.0
    %917 = vmatprep.subr.mxu0 0.0
    %918 = vmatpush1.xpose.msra.mxu0 0.0
    %919 = vmatprep.subr.mxu0 0.0
    %920 = vmatpush1.xpose.msra.mxu0 0.0
    %921 = vmatprep.subr.mxu0 0.0
    %922 = vmatpush1.xpose.msra.mxu0 0.0
    %923 = vmatprep.subr.mxu0 0.0
    %924 = vmatpush1.xpose.msra.mxu0 0.0
    %925 = vmatprep.subr.mxu0 0.0
    %926 = vmatpush1.xpose.msra.mxu0 0.0
    %927 = vmatprep.subr.mxu0 0.0
    %928 = vmatpush1.xpose.msra.mxu0 0.0
    %929 = vmatprep.subr.mxu0 0.0
    %930 = vmatpush1.xpose.msra.mxu0 0.0
    %931 = vmatprep.subr.mxu0 0.0
    %932 = vmatpush1.xpose.msra.mxu0 0.0
    %933 = vmatprep.subr.mxu0 0.0
    %934 = vmatpush1.xpose.msra.mxu0 0.0
    %935 = vmatprep.subr.mxu0 0.0
    %936 = vmatpush1.xpose.msra.mxu0 0.0
    %937 = vmatprep.subr.mxu0 0.0
    %938 = vmatpush1.xpose.msra.mxu0 0.0
    %939 = vmatprep.subr.mxu0 0.0
    %940 = vmatpush1.xpose.msra.mxu0 0.0
    %941 = vmatprep.subr.mxu0 0.0
    %942 = vmatpush1.xpose.msra.mxu0 0.0
    %943 = vmatprep.subr.mxu0 0.0
    %944 = vmatpush1.xpose.msra.mxu0 0.0
    %945 = vmatprep.subr.mxu0 0.0
    %946 = vmatpush1.xpose.msra.mxu0 0.0
    %947 = vmatprep.subr.mxu0 0.0
    %948 = vmatpush1.xpose.msra.mxu0 0.0
    %949 = vmatprep.mubr.f32.mxu0 0.0
    %950 = vmatmul.mubr.f32.gmra.mrb[0].mxu0 %v883
    %v951 = vpop.f32.mrb[0].mxu0
    %v952 = vadd.f32 0.0, %v951
    %v953 = vpop.f32.mrb[0].mxu0
    %954 = vdwg.mxu0
    %v955 = vmul.f32 %v952, 0.35355338
    %v956 = vsel %vm450, %v955, -inf
    %957 = vmax.xlane.f32.xlu0 %v956
    %v958 = vpop.xlane.xlu0 %957
    %v959 = vsub.f32 %v955, %v958
    %v960 = vmul.f32 %v959, 1.442695
    %v961 = vpow.pop %v960
    %v962 = vsel %vm450, %v961, 0.0
    %963 = vadd.xlane.f32.xlu0 %v962
    %v964 = vpop.xlane.xlu0 %963
    %v965 = vrcp.pop %v964
    %v966 = vmul.f32 %v961, %v965
    %v967 = vmul.f32 %v362, %v879
    %v969 = vsel %vm450, %v966, 0
    %971 = vmatprep.subr.mxu0 0.0
    %972 = vmatpush1.msra.mxu0 %v967
    %973 = vmatprep.subr.mxu0 0.0
    %974 = vmatpush1.msra.mxu0 0.0
    %975 = vmatprep.subr.mxu0 0.0
    %976 = vmatpush1.msra.mxu0 0.0
    %977 = vmatprep.subr.mxu0 0.0
    %978 = vmatpush1.msra.mxu0 0.0
    %979 = vmatprep.subr.mxu0 0.0
    %980 = vmatpush1.msra.mxu0 0.0
    %981 = vmatprep.subr.mxu0 0.0
    %982 = vmatpush1.msra.mxu0 0.0
    %983 = vmatprep.subr.mxu0 0.0
    %984 = vmatpush1.msra.mxu0 0.0
    %985 = vmatprep.subr.mxu0 0.0
    %986 = vmatpush1.msra.mxu0 0.0
    %987 = vmatprep.subr.mxu0 0.0
    %988 = vmatpush1.msra.mxu0 0.0
    %989 = vmatprep.subr.mxu0 0.0
    %990 = vmatpush1.msra.mxu0 0.0
    %991 = vmatprep.subr.mxu0 0.0
    %992 = vmatpush1.msra.mxu0 0.0
    %993 = vmatprep.subr.mxu0 0.0
    %994 = vmatpush1.msra.mxu0 0.0
    %995 = vmatprep.subr.mxu0 0.0
    %996 = vmatpush1.msra.mxu0 0.0
    %997 = vmatprep.subr.mxu0 0.0
    %998 = vmatpush1.msra.mxu0 0.0
    %999 = vmatprep.subr.mxu0 0.0
    %1000 = vmatpush1.msra.mxu0 0.0
    %1001 = vmatprep.subr.mxu0 0.0
    %1002 = vmatpush1.msra.mxu0 0.0
    %1003 = vmatprep.subr.mxu0 0.0
    %1004 = vmatpush1.msra.mxu0 0.0
    %1005 = vmatprep.subr.mxu0 0.0
    %1006 = vmatpush1.msra.mxu0 0.0
    %1007 = vmatprep.subr.mxu0 0.0
    %1008 = vmatpush1.msra.mxu0 0.0
    %1009 = vmatprep.subr.mxu0 0.0
    %1010 = vmatpush1.msra.mxu0 0.0
    %1011 = vmatprep.subr.mxu0 0.0
    %1012 = vmatpush1.msra.mxu0 0.0
    %1013 = vmatprep.subr.mxu0 0.0
    %1014 = vmatpush1.msra.mxu0 0.0
    %1015 = vmatprep.subr.mxu0 0.0
    %1016 = vmatpush1.msra.mxu0 0.0
    %1017 = vmatprep.subr.mxu0 0.0
    %1018 = vmatpush1.msra.mxu0 0.0
    %1019 = vmatprep.subr.mxu0 0.0
    %1020 = vmatpush1.msra.mxu0 0.0
    %1021 = vmatprep.subr.mxu0 0.0
    %1022 = vmatpush1.msra.mxu0 0.0
    %1023 = vmatprep.subr.mxu0 0.0
    %1024 = vmatpush1.msra.mxu0 0.0
    %1025 = vmatprep.subr.mxu0 0.0
    %1026 = vmatpush1.msra.mxu0 0.0
    %1027 = vmatprep.subr.mxu0 0.0
    %1028 = vmatpush1.msra.mxu0 0.0
    %1029 = vmatprep.subr.mxu0 0.0
    %1030 = vmatpush1.msra.mxu0 0.0
    %1031 = vmatprep.subr.mxu0 0.0
    %1032 = vmatpush1.msra.mxu0 0.0
    %1033 = vmatprep.subr.mxu0 0.0
    %1034 = vmatpush1.msra.mxu0 0.0
    %1035 = vmatprep.mubr.f32.mxu0 0.0
    %1036 = vmatmul.mubr.f32.gmra.mrb[0].mxu0 %v969
    %v1037 = vpop.f32.mrb[0].mxu0
    %v1038 = vadd.f32 0.0, %v1037
    %v1039 = vpop.f32.mrb[0].mxu0
    %1040 = vdwg.mxu0
    %v1041 = vadd.f32 %v872, %v1038
    %v1042 = vld [vmem:[#allocation10] sm:$0xff]
    %v1044 = vsel %vm143, %v1042, 0
    %v1047 = vsel %vm143, %v1041, 0
    %1049 = vmatprep.subr.mxu0 0.0
    %1050 = vmatpush1.xpose.msra.mxu0 %v1047
    %1051 = vmatprep.subr.mxu0 0.0
    %1052 = vmatpush1.xpose.msra.mxu0 0.0
    %1053 = vmatprep.subr.mxu0 0.0
    %1054 = vmatpush1.xpose.msra.mxu0 0.0
    %1055 = vmatprep.subr.mxu0 0.0
    %1056 = vmatpush1.xpose.msra.mxu0 0.0
    %1057 = vmatprep.subr.mxu0 0.0
    %1058 = vmatpush1.xpose.msra.mxu0 0.0
    %1059 = vmatprep.subr.mxu0 0.0
    %1060 = vmatpush1.xpose.msra.mxu0 0.0
    %1061 = vmatprep.subr.mxu0 0.0
    %1062 = vmatpush1.xpose.msra.mxu0 0.0
    %1063 = vmatprep.subr.mxu0 0.0
    %1064 = vmatpush1.xpose.msra.mxu0 0.0
    %1065 = vmatprep.subr.mxu0 0.0
    %1066 = vmatpush1.xpose.msra.mxu0 0.0
    %1067 = vmatprep.subr.mxu0 0.0
    %1068 = vmatpush1.xpose.msra.mxu0 0.0
    %1069 = vmatprep.subr.mxu0 0.0
    %1070 = vmatpush1.xpose.msra.mxu0 0.0
    %1071 = vmatprep.subr.mxu0 0.0
    %1072 = vmatpush1.xpose.msra.mxu0 0.0
    %1073 = vmatprep.subr.mxu0 0.0
    %1074 = vmatpush1.xpose.msra.mxu0 0.0
    %1075 = vmatprep.subr.mxu0 0.0
    %1076 = vmatpush1.xpose.msra.mxu0 0.0
    %1077 = vmatprep.subr.mxu0 0.0
    %1078 = vmatpush1.xpose.msra.mxu0 0.0
    %1079 = vmatprep.subr.mxu0 0.0
    %1080 = vmatpush1.xpose.msra.mxu0 0.0
    %1081 = vmatprep.subr.mxu0 0.0
    %1082 = vmatpush1.xpose.msra.mxu0 0.0
    %1083 = vmatprep.subr.mxu0 0.0
    %1084 = vmatpush1.xpose.msra.mxu0 0.0
    %1085 = vmatprep.subr.mxu0 0.0
    %1086 = vmatpush1.xpose.msra.mxu0 0.0
    %1087 = vmatprep.subr.mxu0 0.0
    %1088 = vmatpush1.xpose.msra.mxu0 0.0
    %1089 = vmatprep.subr.mxu0 0.0
    %1090 = vmatpush1.xpose.msra.mxu0 0.0
    %1091 = vmatprep.subr.mxu0 0.0
    %1092 = vmatpush1.xpose.msra.mxu0 0.0
    %1093 = vmatprep.subr.mxu0 0.0
    %1094 = vmatpush1.xpose.msra.mxu0 0.0
    %1095 = vmatprep.subr.mxu0 0.0
    %1096 = vmatpush1.xpose.msra.mxu0 0.0
    %1097 = vmatprep.subr.mxu0 0.0
    %1098 = vmatpush1.xpose.msra.mxu0 0.0
    %1099 = vmatprep.subr.mxu0 0.0
    %1100 = vmatpush1.xpose.msra.mxu0 0.0
    %1101 = vmatprep.subr.mxu0 0.0
    %1102 = vmatpush1.xpose.msra.mxu0 0.0
    %1103 = vmatprep.subr.mxu0 0.0
    %1104 = vmatpush1.xpose.msra.mxu0 0.0
    %1105 = vmatprep.subr.mxu0 0.0
    %1106 = vmatpush1.xpose.msra.mxu0 0.0
    %1107 = vmatprep.subr.mxu0 0.0
    %1108 = vmatpush1.xpose.msra.mxu0 0.0
    %1109 = vmatprep.subr.mxu0 0.0
    %1110 = vmatpush1.xpose.msra.mxu0 0.0
    %1111 = vmatprep.subr.mxu0 0.0
    %1112 = vmatpush1.xpose.msra.mxu0 0.0
    %1113 = vmatprep.mubr.f32.mxu0 0.0
    %1114 = vmatmul.mubr.f32.gmra.mrb[0].mxu0 %v1044
    %v1115 = vpop.f32.mrb[0].mxu0
    %v1116 = vadd.f32 0.0, %v1115
    %v1117 = vpop.f32.mrb[0].mxu0
    %1118 = vdwg.mxu0
    %v1119 = vld [vmem:[#allocation11] sm:$0xff]
    %s1120 = scalar_lea.vmem [#allocation10], 8
    %v1121 = vld [vmem:[%s1120] sm:$0xff]
    %v1123 = vsel %vm143, %v1121, 0
    %1125 = vmatprep.subr.mxu0 0.0
    %1126 = vmatpush1.xpose.msra.mxu0 %v1047
    %1127 = vmatprep.subr.mxu0 0.0
    %1128 = vmatpush1.xpose.msra.mxu0 0.0
    %1129 = vmatprep.subr.mxu0 0.0
    %1130 = vmatpush1.xpose.msra.mxu0 0.0
    %1131 = vmatprep.subr.mxu0 0.0
    %1132 = vmatpush1.xpose.msra.mxu0 0.0
    %1133 = vmatprep.subr.mxu0 0.0
    %1134 = vmatpush1.xpose.msra.mxu0 0.0
    %1135 = vmatprep.subr.mxu0 0.0
    %1136 = vmatpush1.xpose.msra.mxu0 0.0
    %1137 = vmatprep.subr.mxu0 0.0
    %1138 = vmatpush1.xpose.msra.mxu0 0.0
    %1139 = vmatprep.subr.mxu0 0.0
    %1140 = vmatpush1.xpose.msra.mxu0 0.0
    %1141 = vmatprep.subr.mxu0 0.0
    %1142 = vmatpush1.xpose.msra.mxu0 0.0
    %1143 = vmatprep.subr.mxu0 0.0
    %1144 = vmatpush1.xpose.msra.mxu0 0.0
    %1145 = vmatprep.subr.mxu0 0.0
    %1146 = vmatpush1.xpose.msra.mxu0 0.0
    %1147 = vmatprep.subr.mxu0 0.0
    %1148 = vmatpush1.xpose.msra.mxu0 0.0
    %1149 = vmatprep.subr.mxu0 0.0
    %1150 = vmatpush1.xpose.msra.mxu0 0.0
    %1151 = vmatprep.subr.mxu0 0.0
    %1152 = vmatpush1.xpose.msra.mxu0 0.0
    %1153 = vmatprep.subr.mxu0 0.0
    %1154 = vmatpush1.xpose.msra.mxu0 0.0
    %1155 = vmatprep.subr.mxu0 0.0
    %1156 = vmatpush1.xpose.msra.mxu0 0.0
    %1157 = vmatprep.subr.mxu0 0.0
    %1158 = vmatpush1.xpose.msra.mxu0 0.0
    %1159 = vmatprep.subr.mxu0 0.0
    %1160 = vmatpush1.xpose.msra.mxu0 0.0
    %1161 = vmatprep.subr.mxu0 0.0
    %1162 = vmatpush1.xpose.msra.mxu0 0.0
    %1163 = vmatprep.subr.mxu0 0.0
    %1164 = vmatpush1.xpose.msra.mxu0 0.0
    %1165 = vmatprep.subr.mxu0 0.0
    %1166 = vmatpush1.xpose.msra.mxu0 0.0
    %1167 = vmatprep.subr.mxu0 0.0
    %1168 = vmatpush1.xpose.msra.mxu0 0.0
    %1169 = vmatprep.subr.mxu0 0.0
    %1170 = vmatpush1.xpose.msra.mxu0 0.0
    %1171 = vmatprep.subr.mxu0 0.0
    %1172 = vmatpush1.xpose.msra.mxu0 0.0
    %1173 = vmatprep.subr.mxu0 0.0
    %1174 = vmatpush1.xpose.msra.mxu0 0.0
    %1175 = vmatprep.subr.mxu0 0.0
    %1176 = vmatpush1.xpose.msra.mxu0 0.0
    %1177 = vmatprep.subr.mxu0 0.0
    %1178 = vmatpush1.xpose.msra.mxu0 0.0
    %1179 = vmatprep.subr.mxu0 0.0
    %1180 = vmatpush1.xpose.msra.mxu0 0.0
    %1181 = vmatprep.subr.mxu0 0.0
    %1182 = vmatpush1.xpose.msra.mxu0 0.0
    %1183 = vmatprep.subr.mxu0 0.0
    %1184 = vmatpush1.xpose.msra.mxu0 0.0
    %1185 = vmatprep.subr.mxu0 0.0
    %1186 = vmatpush1.xpose.msra.mxu0 0.0
    %1187 = vmatprep.subr.mxu0 0.0
    %1188 = vmatpush1.xpose.msra.mxu0 0.0
    %1189 = vmatprep.mubr.f32.mxu0 0.0
    %1190 = vmatmul.mubr.f32.gmra.mrb[0].mxu0 %v1123
    %v1191 = vpop.f32.mrb[0].mxu0
    %v1192 = vadd.f32 0.0, %v1191
    %v1193 = vpop.f32.mrb[0].mxu0
    %1194 = vdwg.mxu0
    %s1195 = scalar_lea.vmem [#allocation11], 8
    %v1196 = vld [vmem:[%s1195] sm:$0xff]
    %v1198 = vsel %vm450, %v1192, 0
    %1200 = vmatprep.subr.mxu0 0.0
    %1201 = vmatpush1.msra.mxu0 %v1196
    %1202 = vmatprep.subr.mxu0 0.0
    %1203 = vmatpush1.msra.mxu0 0.0
    %1204 = vmatprep.subr.mxu0 0.0
    %1205 = vmatpush1.msra.mxu0 0.0
    %1206 = vmatprep.subr.mxu0 0.0
    %1207 = vmatpush1.msra.mxu0 0.0
    %1208 = vmatprep.subr.mxu0 0.0
    %1209 = vmatpush1.msra.mxu0 0.0
    %1210 = vmatprep.subr.mxu0 0.0
    %1211 = vmatpush1.msra.mxu0 0.0
    %1212 = vmatprep.subr.mxu0 0.0
    %1213 = vmatpush1.msra.mxu0 0.0
    %1214 = vmatprep.subr.mxu0 0.0
    %1215 = vmatpush1.msra.mxu0 0.0
    %1216 = vmatprep.subr.mxu0 0.0
    %1217 = vmatpush1.msra.mxu0 0.0
    %1218 = vmatprep.subr.mxu0 0.0
    %1219 = vmatpush1.msra.mxu0 0.0
    %1220 = vmatprep.subr.mxu0 0.0
    %1221 = vmatpush1.msra.mxu0 0.0
    %1222 = vmatprep.subr.mxu0 0.0
    %1223 = vmatpush1.msra.mxu0 0.0
    %1224 = vmatprep.subr.mxu0 0.0
    %1225 = vmatpush1.msra.mxu0 0.0
    %1226 = vmatprep.subr.mxu0 0.0
    %1227 = vmatpush1.msra.mxu0 0.0
    %1228 = vmatprep.subr.mxu0 0.0
    %1229 = vmatpush1.msra.mxu0 0.0
    %1230 = vmatprep.subr.mxu0 0.0
    %1231 = vmatpush1.msra.mxu0 0.0
    %1232 = vmatprep.subr.mxu0 0.0
    %1233 = vmatpush1.msra.mxu0 0.0
    %1234 = vmatprep.subr.mxu0 0.0
    %1235 = vmatpush1.msra.mxu0 0.0
    %1236 = vmatprep.subr.mxu0 0.0
    %1237 = vmatpush1.msra.mxu0 0.0
    %1238 = vmatprep.subr.mxu0 0.0
    %1239 = vmatpush1.msra.mxu0 0.0
    %1240 = vmatprep.subr.mxu0 0.0
    %1241 = vmatpush1.msra.mxu0 0.0
    %1242 = vmatprep.subr.mxu0 0.0
    %1243 = vmatpush1.msra.mxu0 0.0
    %1244 = vmatprep.subr.mxu0 0.0
    %1245 = vmatpush1.msra.mxu0 0.0
    %1246 = vmatprep.subr.mxu0 0.0
    %1247 = vmatpush1.msra.mxu0 0.0
    %1248 = vmatprep.subr.mxu0 0.0
    %1249 = vmatpush1.msra.mxu0 0.0
    %1250 = vmatprep.subr.mxu0 0.0
    %1251 = vmatpush1.msra.mxu0 0.0
    %1252 = vmatprep.subr.mxu0 0.0
    %1253 = vmatpush1.msra.mxu0 0.0
    %1254 = vmatprep.subr.mxu0 0.0
    %1255 = vmatpush1.msra.mxu0 0.0
    %1256 = vmatprep.subr.mxu0 0.0
    %1257 = vmatpush1.msra.mxu0 0.0
    %1258 = vmatprep.subr.mxu0 0.0
    %1259 = vmatpush1.msra.mxu0 0.0
    %1260 = vmatprep.subr.mxu0 0.0
    %1261 = vmatpush1.msra.mxu0 0.0
    %1262 = vmatprep.subr.mxu0 0.0
    %1263 = vmatpush1.msra.mxu0 0.0
    %1264 = vmatprep.mubr.f32.mxu0 0.0
    %1265 = vmatmul.mubr.f32.gmra.mrb[0].mxu0 %v1198
    %v1266 = vpop.f32.mrb[0].mxu0
    %v1267 = vadd.f32 0.0, %v1266
    %v1268 = vpop.f32.mrb[0].mxu0
    %1269 = vdwg.mxu0
    %v1271 = vsel %vm450, %v1116, 0
    %1273 = vmatprep.subr.mxu0 0.0
    %1274 = vmatpush1.msra.mxu0 %v1119
    %1275 = vmatprep.subr.mxu0 0.0
    %1276 = vmatpush1.msra.mxu0 0.0
    %1277 = vmatprep.subr.mxu0 0.0
    %1278 = vmatpush1.msra.mxu0 0.0
    %1279 = vmatprep.subr.mxu0 0.0
    %1280 = vmatpush1.msra.mxu0 0.0
    %1281 = vmatprep.subr.mxu0 0.0
    %1282 = vmatpush1.msra.mxu0 0.0
    %1283 = vmatprep.subr.mxu0 0.0
    %1284 = vmatpush1.msra.mxu0 0.0
    %1285 = vmatprep.subr.mxu0 0.0
    %1286 = vmatpush1.msra.mxu0 0.0
    %1287 = vmatprep.subr.mxu0 0.0
    %1288 = vmatpush1.msra.mxu0 0.0
    %1289 = vmatprep.subr.mxu0 0.0
    %1290 = vmatpush1.msra.mxu0 0.0
    %1291 = vmatprep.subr.mxu0 0.0
    %1292 = vmatpush1.msra.mxu0 0.0
    %1293 = vmatprep.subr.mxu0 0.0
    %1294 = vmatpush1.msra.mxu0 0.0
    %1295 = vmatprep.subr.mxu0 0.0
    %1296 = vmatpush1.msra.mxu0 0.0
    %1297 = vmatprep.subr.mxu0 0.0
    %1298 = vmatpush1.msra.mxu0 0.0
    %1299 = vmatprep.subr.mxu0 0.0
    %1300 = vmatpush1.msra.mxu0 0.0
    %1301 = vmatprep.subr.mxu0 0.0
    %1302 = vmatpush1.msra.mxu0 0.0
    %1303 = vmatprep.subr.mxu0 0.0
    %1304 = vmatpush1.msra.mxu0 0.0
    %1305 = vmatprep.subr.mxu0 0.0
    %1306 = vmatpush1.msra.mxu0 0.0
    %1307 = vmatprep.subr.mxu0 0.0
    %1308 = vmatpush1.msra.mxu0 0.0
    %1309 = vmatprep.subr.mxu0 0.0
    %1310 = vmatpush1.msra.mxu0 0.0
    %1311 = vmatprep.subr.mxu0 0.0
    %1312 = vmatpush1.msra.mxu0 0.0
    %1313 = vmatprep.subr.mxu0 0.0
    %1314 = vmatpush1.msra.mxu0 0.0
    %1315 = vmatprep.subr.mxu0 0.0
    %1316 = vmatpush1.msra.mxu0 0.0
    %1317 = vmatprep.subr.mxu0 0.0
    %1318 = vmatpush1.msra.mxu0 0.0
    %1319 = vmatprep.subr.mxu0 0.0
    %1320 = vmatpush1.msra.mxu0 0.0
    %1321 = vmatprep.subr.mxu0 0.0
    %1322 = vmatpush1.msra.mxu0 0.0
    %1323 = vmatprep.subr.mxu0 0.0
    %1324 = vmatpush1.msra.mxu0 0.0
    %1325 = vmatprep.subr.mxu0 0.0
    %1326 = vmatpush1.msra.mxu0 0.0
    %1327 = vmatprep.subr.mxu0 0.0
    %1328 = vmatpush1.msra.mxu0 0.0
    %1329 = vmatprep.subr.mxu0 0.0
    %1330 = vmatpush1.msra.mxu0 0.0
    %1331 = vmatprep.subr.mxu0 0.0
    %1332 = vmatpush1.msra.mxu0 0.0
    %1333 = vmatprep.subr.mxu0 0.0
    %1334 = vmatpush1.msra.mxu0 0.0
    %1335 = vmatprep.subr.mxu0 0.0
    %1336 = vmatpush1.msra.mxu0 0.0
    %1337 = vmatprep.mubr.f32.mxu0 0.0
    %1338 = vmatmul.mubr.f32.gmra.mrb[0].mxu0 %v1271
    %v1339 = vpop.f32.mrb[0].mxu0
    %v1340 = vadd.f32 %v1267, %v1339
    %v1341 = vpop.f32.mrb[0].mxu0
    %1342 = vdwg.mxu0
    %s1343 = scalar_lea.vmem [#allocation10], 16
    %v1344 = vld [vmem:[%s1343] sm:$0xff]
    %v1346 = vsel %vm143, %v1344, 0
    %1348 = vmatprep.subr.mxu0 0.0
    %1349 = vmatpush1.xpose.msra.mxu0 %v1047
    %1350 = vmatprep.subr.mxu0 0.0
    %1351 = vmatpush1.xpose.msra.mxu0 0.0
    %1352 = vmatprep.subr.mxu0 0.0
    %1353 = vmatpush1.xpose.msra.mxu0 0.0
    %1354 = vmatprep.subr.mxu0 0.0
    %1355 = vmatpush1.xpose.msra.mxu0 0.0
    %1356 = vmatprep.subr.mxu0 0.0
    %1357 = vmatpush1.xpose.msra.mxu0 0.0
    %1358 = vmatprep.subr.mxu0 0.0
    %1359 = vmatpush1.xpose.msra.mxu0 0.0
    %1360 = vmatprep.subr.mxu0 0.0
    %1361 = vmatpush1.xpose.msra.mxu0 0.0
    %1362 = vmatprep.subr.mxu0 0.0
    %1363 = vmatpush1.xpose.msra.mxu0 0.0
    %1364 = vmatprep.subr.mxu0 0.0
    %1365 = vmatpush1.xpose.msra.mxu0 0.0
    %1366 = vmatprep.subr.mxu0 0.0
    %1367 = vmatpush1.xpose.msra.mxu0 0.0
    %1368 = vmatprep.subr.mxu0 0.0
    %1369 = vmatpush1.xpose.msra.mxu0 0.0
    %1370 = vmatprep.subr.mxu0 0.0
    %1371 = vmatpush1.xpose.msra.mxu0 0.0
    %1372 = vmatprep.subr.mxu0 0.0
    %1373 = vmatpush1.xpose.msra.mxu0 0.0
    %1374 = vmatprep.subr.mxu0 0.0
    %1375 = vmatpush1.xpose.msra.mxu0 0.0
    %1376 = vmatprep.subr.mxu0 0.0
    %1377 = vmatpush1.xpose.msra.mxu0 0.0
    %1378 = vmatprep.subr.mxu0 0.0
    %1379 = vmatpush1.xpose.msra.mxu0 0.0
    %1380 = vmatprep.subr.mxu0 0.0
    %1381 = vmatpush1.xpose.msra.mxu0 0.0
    %1382 = vmatprep.subr.mxu0 0.0
    %1383 = vmatpush1.xpose.msra.mxu0 0.0
    %1384 = vmatprep.subr.mxu0 0.0
    %1385 = vmatpush1.xpose.msra.mxu0 0.0
    %1386 = vmatprep.subr.mxu0 0.0
    %1387 = vmatpush1.xpose.msra.mxu0 0.0
    %1388 = vmatprep.subr.mxu0 0.0
    %1389 = vmatpush1.xpose.msra.mxu0 0.0
    %1390 = vmatprep.subr.mxu0 0.0
    %1391 = vmatpush1.xpose.msra.mxu0 0.0
    %1392 = vmatprep.subr.mxu0 0.0
    %1393 = vmatpush1.xpose.msra.mxu0 0.0
    %1394 = vmatprep.subr.mxu0 0.0
    %1395 = vmatpush1.xpose.msra.mxu0 0.0
    %1396 = vmatprep.subr.mxu0 0.0
    %1397 = vmatpush1.xpose.msra.mxu0 0.0
    %1398 = vmatprep.subr.mxu0 0.0
    %1399 = vmatpush1.xpose.msra.mxu0 0.0
    %1400 = vmatprep.subr.mxu0 0.0
    %1401 = vmatpush1.xpose.msra.mxu0 0.0
    %1402 = vmatprep.subr.mxu0 0.0
    %1403 = vmatpush1.xpose.msra.mxu0 0.0
    %1404 = vmatprep.subr.mxu0 0.0
    %1405 = vmatpush1.xpose.msra.mxu0 0.0
    %1406 = vmatprep.subr.mxu0 0.0
    %1407 = vmatpush1.xpose.msra.mxu0 0.0
    %1408 = vmatprep.subr.mxu0 0.0
    %1409 = vmatpush1.xpose.msra.mxu0 0.0
    %1410 = vmatprep.subr.mxu0 0.0
    %1411 = vmatpush1.xpose.msra.mxu0 0.0
    %1412 = vmatprep.mubr.f32.mxu0 0.0
    %1413 = vmatmul.mubr.f32.gmra.mrb[0].mxu0 %v1346
    %v1414 = vpop.f32.mrb[0].mxu0
    %v1415 = vadd.f32 0.0, %v1414
    %v1416 = vpop.f32.mrb[0].mxu0
    %1417 = vdwg.mxu0
    %s1418 = scalar_lea.vmem [#allocation11], 16
    %v1419 = vld [vmem:[%s1418] sm:$0xff]
    %v1421 = vsel %vm450, %v1415, 0
    %1423 = vmatprep.subr.mxu0 0.0
    %1424 = vmatpush1.msra.mxu0 %v1419
    %1425 = vmatprep.subr.mxu0 0.0
    %1426 = vmatpush1.msra.mxu0 0.0
    %1427 = vmatprep.subr.mxu0 0.0
    %1428 = vmatpush1.msra.mxu0 0.0
    %1429 = vmatprep.subr.mxu0 0.0
    %1430 = vmatpush1.msra.mxu0 0.0
    %1431 = vmatprep.subr.mxu0 0.0
    %1432 = vmatpush1.msra.mxu0 0.0
    %1433 = vmatprep.subr.mxu0 0.0
    %1434 = vmatpush1.msra.mxu0 0.0
    %1435 = vmatprep.subr.mxu0 0.0
    %1436 = vmatpush1.msra.mxu0 0.0
    %1437 = vmatprep.subr.mxu0 0.0
    %1438 = vmatpush1.msra.mxu0 0.0
    %1439 = vmatprep.subr.mxu0 0.0
    %1440 = vmatpush1.msra.mxu0 0.0
    %1441 = vmatprep.subr.mxu0 0.0
    %1442 = vmatpush1.msra.mxu0 0.0
    %1443 = vmatprep.subr.mxu0 0.0
    %1444 = vmatpush1.msra.mxu0 0.0
    %1445 = vmatprep.subr.mxu0 0.0
    %1446 = vmatpush1.msra.mxu0 0.0
    %1447 = vmatprep.subr.mxu0 0.0
    %1448 = vmatpush1.msra.mxu0 0.0
    %1449 = vmatprep.subr.mxu0 0.0
    %1450 = vmatpush1.msra.mxu0 0.0
    %1451 = vmatprep.subr.mxu0 0.0
    %1452 = vmatpush1.msra.mxu0 0.0
    %1453 = vmatprep.subr.mxu0 0.0
    %1454 = vmatpush1.msra.mxu0 0.0
    %1455 = vmatprep.subr.mxu0 0.0
    %1456 = vmatpush1.msra.mxu0 0.0
    %1457 = vmatprep.subr.mxu0 0.0
    %1458 = vmatpush1.msra.mxu0 0.0
    %1459 = vmatprep.subr.mxu0 0.0
    %1460 = vmatpush1.msra.mxu0 0.0
    %1461 = vmatprep.subr.mxu0 0.0
    %1462 = vmatpush1.msra.mxu0 0.0
    %1463 = vmatprep.subr.mxu0 0.0
    %1464 = vmatpush1.msra.mxu0 0.0
    %1465 = vmatprep.subr.mxu0 0.0
    %1466 = vmatpush1.msra.mxu0 0.0
    %1467 = vmatprep.subr.mxu0 0.0
    %1468 = vmatpush1.msra.mxu0 0.0
    %1469 = vmatprep.subr.mxu0 0.0
    %1470 = vmatpush1.msra.mxu0 0.0
    %1471 = vmatprep.subr.mxu0 0.0
    %1472 = vmatpush1.msra.mxu0 0.0
    %1473 = vmatprep.subr.mxu0 0.0
    %1474 = vmatpush1.msra.mxu0 0.0
    %1475 = vmatprep.subr.mxu0 0.0
    %1476 = vmatpush1.msra.mxu0 0.0
    %1477 = vmatprep.subr.mxu0 0.0
    %1478 = vmatpush1.msra.mxu0 0.0
    %1479 = vmatprep.subr.mxu0 0.0
    %1480 = vmatpush1.msra.mxu0 0.0
    %1481 = vmatprep.subr.mxu0 0.0
    %1482 = vmatpush1.msra.mxu0 0.0
    %1483 = vmatprep.subr.mxu0 0.0
    %1484 = vmatpush1.msra.mxu0 0.0
    %1485 = vmatprep.subr.mxu0 0.0
    %1486 = vmatpush1.msra.mxu0 0.0
    %1487 = vmatprep.mubr.f32.mxu0 0.0
    %1488 = vmatmul.mubr.f32.gmra.mrb[0].mxu0 %v1421
    %v1489 = vpop.f32.mrb[0].mxu0
    %v1490 = vadd.f32 0.0, %v1489
    %v1491 = vpop.f32.mrb[0].mxu0
    %1492 = vdwg.mxu0
    %v1493 = vadd.f32 %v1340, %v1490
    %s1494 = scalar_lea.vmem [#allocation10], 24
    %v1495 = vld [vmem:[%s1494] sm:$0xff]
    %v1497 = vsel %vm143, %v1495, 0
    %1499 = vmatprep.subr.mxu0 0.0
    %1500 = vmatpush1.xpose.msra.mxu0 %v1047
    %1501 = vmatprep.subr.mxu0 0.0
    %1502 = vmatpush1.xpose.msra.mxu0 0.0
    %1503 = vmatprep.subr.mxu0 0.0
    %1504 = vmatpush1.xpose.msra.mxu0 0.0
    %1505 = vmatprep.subr.mxu0 0.0
    %1506 = vmatpush1.xpose.msra.mxu0 0.0
    %1507 = vmatprep.subr.mxu0 0.0
    %1508 = vmatpush1.xpose.msra.mxu0 0.0
    %1509 = vmatprep.subr.mxu0 0.0
    %1510 = vmatpush1.xpose.msra.mxu0 0.0
    %1511 = vmatprep.subr.mxu0 0.0
    %1512 = vmatpush1.xpose.msra.mxu0 0.0
    %1513 = vmatprep.subr.mxu0 0.0
    %1514 = vmatpush1.xpose.msra.mxu0 0.0
    %1515 = vmatprep.subr.mxu0 0.0
    %1516 = vmatpush1.xpose.msra.mxu0 0.0
    %1517 = vmatprep.subr.mxu0 0.0
    %1518 = vmatpush1.xpose.msra.mxu0 0.0
    %1519 = vmatprep.subr.mxu0 0.0
    %1520 = vmatpush1.xpose.msra.mxu0 0.0
    %1521 = vmatprep.subr.mxu0 0.0
    %1522 = vmatpush1.xpose.msra.mxu0 0.0
    %1523 = vmatprep.subr.mxu0 0.0
    %1524 = vmatpush1.xpose.msra.mxu0 0.0
    %1525 = vmatprep.subr.mxu0 0.0
    %1526 = vmatpush1.xpose.msra.mxu0 0.0
    %1527 = vmatprep.subr.mxu0 0.0
    %1528 = vmatpush1.xpose.msra.mxu0 0.0
    %1529 = vmatprep.subr.mxu0 0.0
    %1530 = vmatpush1.xpose.msra.mxu0 0.0
    %1531 = vmatprep.subr.mxu0 0.0
    %1532 = vmatpush1.xpose.msra.mxu0 0.0
    %1533 = vmatprep.subr.mxu0 0.0
    %1534 = vmatpush1.xpose.msra.mxu0 0.0
    %1535 = vmatprep.subr.mxu0 0.0
    %1536 = vmatpush1.xpose.msra.mxu0 0.0
    %1537 = vmatprep.subr.mxu0 0.0
    %1538 = vmatpush1.xpose.msra.mxu0 0.0
    %1539 = vmatprep.subr.mxu0 0.0
    %1540 = vmatpush1.xpose.msra.mxu0 0.0
    %1541 = vmatprep.subr.mxu0 0.0
    %1542 = vmatpush1.xpose.msra.mxu0 0.0
    %1543 = vmatprep.subr.mxu0 0.0
    %1544 = vmatpush1.xpose.msra.mxu0 0.0
    %1545 = vmatprep.subr.mxu0 0.0
    %1546 = vmatpush1.xpose.msra.mxu0 0.0
    %1547 = vmatprep.subr.mxu0 0.0
    %1548 = vmatpush1.xpose.msra.mxu0 0.0
    %1549 = vmatprep.subr.mxu0 0.0
    %1550 = vmatpush1.xpose.msra.mxu0 0.0
    %1551 = vmatprep.subr.mxu0 0.0
    %1552 = vmatpush1.xpose.msra.mxu0 0.0
    %1553 = vmatprep.subr.mxu0 0.0
    %1554 = vmatpush1.xpose.msra.mxu0 0.0
    %1555 = vmatprep.subr.mxu0 0.0
    %1556 = vmatpush1.xpose.msra.mxu0 0.0
    %1557 = vmatprep.subr.mxu0 0.0
    %1558 = vmatpush1.xpose.msra.mxu0 0.0
    %1559 = vmatprep.subr.mxu0 0.0
    %1560 = vmatpush1.xpose.msra.mxu0 0.0
    %1561 = vmatprep.subr.mxu0 0.0
    %1562 = vmatpush1.xpose.msra.mxu0 0.0
    %1563 = vmatprep.mubr.f32.mxu0 0.0
    %1564 = vmatmul.mubr.f32.gmra.mrb[0].mxu0 %v1497
    %v1565 = vpop.f32.mrb[0].mxu0
    %v1566 = vadd.f32 0.0, %v1565
    %v1567 = vpop.f32.mrb[0].mxu0
    %1568 = vdwg.mxu0
    %s1569 = scalar_lea.vmem [#allocation11], 24
    %v1570 = vld [vmem:[%s1569] sm:$0xff]
    %v1572 = vsel %vm450, %v1566, 0
    %1574 = vmatprep.subr.mxu0 0.0
    %1575 = vmatpush1.msra.mxu0 %v1570
    %1576 = vmatprep.subr.mxu0 0.0
    %1577 = vmatpush1.msra.mxu0 0.0
    %1578 = vmatprep.subr.mxu0 0.0
    %1579 = vmatpush1.msra.mxu0 0.0
    %1580 = vmatprep.subr.mxu0 0.0
    %1581 = vmatpush1.msra.mxu0 0.0
    %1582 = vmatprep.subr.mxu0 0.0
    %1583 = vmatpush1.msra.mxu0 0.0
    %1584 = vmatprep.subr.mxu0 0.0
    %1585 = vmatpush1.msra.mxu0 0.0
    %1586 = vmatprep.subr.mxu0 0.0
    %1587 = vmatpush1.msra.mxu0 0.0
    %1588 = vmatprep.subr.mxu0 0.0
    %1589 = vmatpush1.msra.mxu0 0.0
    %1590 = vmatprep.subr.mxu0 0.0
    %1591 = vmatpush1.msra.mxu0 0.0
    %1592 = vmatprep.subr.mxu0 0.0
    %1593 = vmatpush1.msra.mxu0 0.0
    %1594 = vmatprep.subr.mxu0 0.0
    %1595 = vmatpush1.msra.mxu0 0.0
    %1596 = vmatprep.subr.mxu0 0.0
    %1597 = vmatpush1.msra.mxu0 0.0
    %1598 = vmatprep.subr.mxu0 0.0
    %1599 = vmatpush1.msra.mxu0 0.0
    %1600 = vmatprep.subr.mxu0 0.0
    %1601 = vmatpush1.msra.mxu0 0.0
    %1602 = vmatprep.subr.mxu0 0.0
    %1603 = vmatpush1.msra.mxu0 0.0
    %1604 = vmatprep.subr.mxu0 0.0
    %1605 = vmatpush1.msra.mxu0 0.0
    %1606 = vmatprep.subr.mxu0 0.0
    %1607 = vmatpush1.msra.mxu0 0.0
    %1608 = vmatprep.subr.mxu0 0.0
    %1609 = vmatpush1.msra.mxu0 0.0
    %1610 = vmatprep.subr.mxu0 0.0
    %1611 = vmatpush1.msra.mxu0 0.0
    %1612 = vmatprep.subr.mxu0 0.0
    %1613 = vmatpush1.msra.mxu0 0.0
    %1614 = vmatprep.subr.mxu0 0.0
    %1615 = vmatpush1.msra.mxu0 0.0
    %1616 = vmatprep.subr.mxu0 0.0
    %1617 = vmatpush1.msra.mxu0 0.0
    %1618 = vmatprep.subr.mxu0 0.0
    %1619 = vmatpush1.msra.mxu0 0.0
    %1620 = vmatprep.subr.mxu0 0.0
    %1621 = vmatpush1.msra.mxu0 0.0
    %1622 = vmatprep.subr.mxu0 0.0
    %1623 = vmatpush1.msra.mxu0 0.0
    %1624 = vmatprep.subr.mxu0 0.0
    %1625 = vmatpush1.msra.mxu0 0.0
    %1626 = vmatprep.subr.mxu0 0.0
    %1627 = vmatpush1.msra.mxu0 0.0
    %1628 = vmatprep.subr.mxu0 0.0
    %1629 = vmatpush1.msra.mxu0 0.0
    %1630 = vmatprep.subr.mxu0 0.0
    %1631 = vmatpush1.msra.mxu0 0.0
    %1632 = vmatprep.subr.mxu0 0.0
    %1633 = vmatpush1.msra.mxu0 0.0
    %1634 = vmatprep.subr.mxu0 0.0
    %1635 = vmatpush1.msra.mxu0 0.0
    %1636 = vmatprep.subr.mxu0 0.0
    %1637 = vmatpush1.msra.mxu0 0.0
    %1638 = vmatprep.mubr.f32.mxu0 0.0
    %1639 = vmatmul.mubr.f32.gmra.mrb[0].mxu0 %v1572
    %v1640 = vpop.f32.mrb[0].mxu0
    %v1641 = vadd.f32 0.0, %v1640
    %v1642 = vpop.f32.mrb[0].mxu0
    %1643 = vdwg.mxu0
    %v1644 = vadd.f32 %v1493, %v1641
    %v1645 = vadd.f32 %v1644, %v138
    %v1646 = vld [vmem:[%s9] sm:$0x1]
    %v1647 = vld [vmem:[%s10] sm:$0x1]
    %v1648 = vsel %vm143, %v1645, 0.0
    %1649 = vadd.xlane.f32.xlu0 %v1648
    %v1650 = vpop.xlane.xlu0 %1649
    %v1651 = vrcp.pop 32.0
    %v1652 = vmul.f32 %v1650, %v1651
    %v1653 = vsub.f32 %v1645, %v1652
    %v1654 = vmul.f32 %v1653, %v1653
    %v1655 = vsel %vm143, %v1654, 0.0
    %1656 = vadd.xlane.f32.xlu0 %v1655
    %v1657 = vpop.xlane.xlu0 %1656
    %v1658 = vmul.f32 %v1657, %v1651
    %v1659 = vadd.f32 %v1658, 1e-05
    %v1660 = vrsqrt.pop %v1659
    %v1661 = vmul.f32 %v1653, %v1660
    %v1663 = vlaneseq
    %v1664 = vshrl.u32 %v1663, 7
    %v1665 = vsub.s32 0, %v1664
    %v1666 = vrot.slane %v1646, %v1665
    %v1668 = vmul.f32 %v1661, %v1666
    %v1670 = vlaneseq
    %v1671 = vshrl.u32 %v1670, 7
    %v1672 = vsub.s32 0, %v1671
    %v1673 = vrot.slane %v1647, %v1672
    %v1675 = vadd.f32 %v1668, %v1673
    %v1676 = vld [vmem:[#allocation13] sm:$0xff]
    %v1677 = vld [vmem:[#allocation13 + $0x8] sm:$0xff]
    %v1678 = vld [vmem:[#allocation13 + $0x10] sm:$0xff]
    %v1679 = vld [vmem:[#allocation13 + $0x18] sm:$0xff]
    %v1680 = vld [vmem:[%s8] sm:$0x1]
    %v1682 = vlaneseq
    %v1683 = vshrl.u32 %v1682, 7
    %v1684 = vsub.s32 0, %v1683
    %v1685 = vrot.slane %v1680, %v1684
    %v1688 = vsel %vm143, %v1675, 0
    %1690 = vmatprep.subr.mxu0 0.0
    %1691 = vmatpush1.msra.mxu0 %v1676
    %1692 = vmatprep.subr.mxu0 0.0
    %1693 = vmatpush1.msra.mxu0 %v1677
    %1694 = vmatprep.subr.mxu0 0.0
    %1695 = vmatpush1.msra.mxu0 %v1678
    %1696 = vmatprep.subr.mxu0 0.0
    %1697 = vmatpush1.msra.mxu0 %v1679
    %1698 = vmatprep.subr.mxu0 0.0
    %1699 = vmatpush1.msra.mxu0 0.0
    %1700 = vmatprep.subr.mxu0 0.0
    %1701 = vmatpush1.msra.mxu0 0.0
    %1702 = vmatprep.subr.mxu0 0.0
    %1703 = vmatpush1.msra.mxu0 0.0
    %1704 = vmatprep.subr.mxu0 0.0
    %1705 = vmatpush1.msra.mxu0 0.0
    %1706 = vmatprep.subr.mxu0 0.0
    %1707 = vmatpush1.msra.mxu0 0.0
    %1708 = vmatprep.subr.mxu0 0.0
    %1709 = vmatpush1.msra.mxu0 0.0
    %1710 = vmatprep.subr.mxu0 0.0
    %1711 = vmatpush1.msra.mxu0 0.0
    %1712 = vmatprep.subr.mxu0 0.0
    %1713 = vmatpush1.msra.mxu0 0.0
    %1714 = vmatprep.subr.mxu0 0.0
    %1715 = vmatpush1.msra.mxu0 0.0
    %1716 = vmatprep.subr.mxu0 0.0
    %1717 = vmatpush1.msra.mxu0 0.0
    %1718 = vmatprep.subr.mxu0 0.0
    %1719 = vmatpush1.msra.mxu0 0.0
    %1720 = vmatprep.subr.mxu0 0.0
    %1721 = vmatpush1.msra.mxu0 0.0
    %1722 = vmatprep.subr.mxu0 0.0
    %1723 = vmatpush1.msra.mxu0 0.0
    %1724 = vmatprep.subr.mxu0 0.0
    %1725 = vmatpush1.msra.mxu0 0.0
    %1726 = vmatprep.subr.mxu0 0.0
    %1727 = vmatpush1.msra.mxu0 0.0
    %1728 = vmatprep.subr.mxu0 0.0
    %1729 = vmatpush1.msra.mxu0 0.0
    %1730 = vmatprep.subr.mxu0 0.0
    %1731 = vmatpush1.msra.mxu0 0.0
    %1732 = vmatprep.subr.mxu0 0.0
    %1733 = vmatpush1.msra.mxu0 0.0
    %1734 = vmatprep.subr.mxu0 0.0
    %1735 = vmatpush1.msra.mxu0 0.0
    %1736 = vmatprep.subr.mxu0 0.0
    %1737 = vmatpush1.msra.mxu0 0.0
    %1738 = vmatprep.subr.mxu0 0.0
    %1739 = vmatpush1.msra.mxu0 0.0
    %1740 = vmatprep.subr.mxu0 0.0
    %1741 = vmatpush1.msra.mxu0 0.0
    %1742 = vmatprep.subr.mxu0 0.0
    %1743 = vmatpush1.msra.mxu0 0.0
    %1744 = vmatprep.subr.mxu0 0.0
    %1745 = vmatpush1.msra.mxu0 0.0
    %1746 = vmatprep.subr.mxu0 0.0
    %1747 = vmatpush1.msra.mxu0 0.0
    %1748 = vmatprep.subr.mxu0 0.0
    %1749 = vmatpush1.msra.mxu0 0.0
    %1750 = vmatprep.subr.mxu0 0.0
    %1751 = vmatpush1.msra.mxu0 0.0
    %1752 = vmatprep.subr.mxu0 0.0
    %1753 = vmatpush1.msra.mxu0 0.0
    %1754 = vmatprep.mubr.f32.mxu0 0.0
    %1755 = vmatmul.mubr.f32.gmra.mrb[0].mxu0 %v1688
    %v1756 = vpop.f32.mrb[0].mxu0
    %v1757 = vadd.f32 %v1685, %v1756
    %v1758 = vpop.f32.mrb[0].mxu0
    %1759 = vdwg.mxu0
    %v1760 = vadd.f32 %v1757, %v1675
    %v1761 = vld [vmem:[%s11] sm:$0x1]
    %v1762 = vld [vmem:[%s12] sm:$0x1]
    %v1763 = vsel %vm143, %v1760, 0.0
    %1764 = vadd.xlane.f32.xlu0 %v1763
    %v1765 = vpop.xlane.xlu0 %1764
    %v1766 = vmul.f32 %v1765, %v1651
    %v1767 = vsub.f32 %v1760, %v1766
    %v1768 = vmul.f32 %v1767, %v1767
    %v1769 = vsel %vm143, %v1768, 0.0
    %1770 = vadd.xlane.f32.xlu0 %v1769
    %v1771 = vpop.xlane.xlu0 %1770
    %v1772 = vmul.f32 %v1771, %v1651
    %v1773 = vadd.f32 %v1772, 1e-05
    %v1774 = vrsqrt.pop %v1773
    %v1775 = vmul.f32 %v1767, %v1774
    %v1777 = vlaneseq
    %v1778 = vshrl.u32 %v1777, 7
    %v1779 = vsub.s32 0, %v1778
    %v1780 = vrot.slane %v1761, %v1779
    %v1782 = vmul.f32 %v1775, %v1780
    %v1784 = vlaneseq
    %v1785 = vshrl.u32 %v1784, 7
    %v1786 = vsub.s32 0, %v1785
    %v1787 = vrot.slane %v1762, %v1786
    %v1789 = vadd.f32 %v1782, %v1787
    %1790 = vst.msk [vmem:[#allocation14] sm:$0xff] %vm143, %v1789
    // Predicated region
    $region82: #{tpu_custom_call.1} parent=1 // pred_check
      _
    $region83: #{tpu_custom_call.1} parent=1 // pred_check_branch
      %1792 = sbr.rel (0) target = $region85
    $region84: #{tpu_custom_call.1} parent=1 // pred_region
      %s1794 = ssub.s32 128, 128
      %1795 = vsyncadd [#allocation4], %s1794
      %s1797 = sshll.u32 [#allocation14], 4
      %s1798 = int_to_ptr.vmem [resolvable:$true] %s1797
      %1800 = dma.vmem_to_hbm [thread:$0]  %s1798, 128, %s13, [#allocation4]
    $region85: #{tpu_custom_call.1} parent=1 // pred_fallthru
      _
    // Predicated region
    $region86: #{tpu_custom_call.1} parent=1 // pred_check
      _
    $region87: #{tpu_custom_call.1} parent=1 // pred_check_branch
      %1802 = sbr.rel (0) target = $region89
    $region88: #{tpu_custom_call.1} parent=1 // pred_region
      %1803 = dma.done [#allocation4], 128
    $region89: #{tpu_custom_call.1} parent=1 // pred_fallthru
      _
    %1804 = vsyncpa [#allocation3], 1
    %1805 = vsyncpa [#allocation6], 1
    %1806 = vsyncpa [#allocation9], 1
    %1807 = vsyncpa [#allocation12], 1
    %1808 = vsyncpa [#allocation4], 1

</llo_original>
